<compile_context>
chip_gen: v7x
topology: tpu7x:2x2x1
jax: 0.10.0
libtpu: 0.0.40
codegen_flags: <defaults>
</compile_context>

<pallas_src>
import jax
import jax.numpy as jnp
from jax import lax
from jax.experimental import pallas as pl
from jax.experimental.pallas import tpu as pltpu


def _shift_matrices(L):
    """One-hot (L, L) shift matrices with zero boundary rows ('same' padding)."""
    r = lax.broadcasted_iota(jnp.int32, (L, L), 0)
    c = lax.broadcasted_iota(jnp.int32, (L, L), 1)
    p_prev = (c == r - 1).astype(jnp.float32)   # (P_prev @ x)[l] = x[l-1], 0 at l=0
    p_next = (c == r + 1).astype(jnp.float32)   # (P_next @ x)[l] = x[l+1], 0 at l=L-1
    return p_prev, p_next


def _pool_matrices(L):
    """One-hot (L//2, L) row selectors for even / odd sequence positions."""
    Lh = L // 2
    r = lax.broadcasted_iota(jnp.int32, (Lh, L), 0)
    c = lax.broadcasted_iota(jnp.int32, (Lh, L), 1)
    s_even = (c == 2 * r).astype(jnp.float32)
    s_odd = (c == 2 * r + 1).astype(jnp.float32)
    return s_even, s_odd


def _conv_bn_relu_pool(x, w_ref, shift):
    """x: (L, C_in) f32; w_ref: (3, C_in, C_out) with BN scale folded in;
    shift: (1, C_out).  Returns (L//2, C_out)."""
    L = x.shape[0]
    p_prev, p_next = _shift_matrices(L)
    x_prev = jnp.dot(p_prev, x, preferred_element_type=jnp.float32)
    x_next = jnp.dot(p_next, x, preferred_element_type=jnp.float32)
    y = (jnp.dot(x_prev, w_ref[0], preferred_element_type=jnp.float32)
         + jnp.dot(x, w_ref[1], preferred_element_type=jnp.float32)
         + jnp.dot(x_next, w_ref[2], preferred_element_type=jnp.float32))
    y = jnp.maximum(y + shift, 0.0)
    s_even, s_odd = _pool_matrices(L)
    return jnp.maximum(jnp.dot(s_even, y, preferred_element_type=jnp.float32),
                       jnp.dot(s_odd, y, preferred_element_type=jnp.float32))


def cnn_kernel(x_ref, w1_ref, b1_ref, w2_ref, b2_ref, o_ref):
    """One batch element, both conv blocks fused, channels on lanes.

    x_ref:  (1, L, C0)     input (seq-major, channel-minor)
    w1_ref: (3, C0, C1)    layer-1 taps, BN scale folded in
    b1_ref: (1, C1)        layer-1 shift (conv bias + BN folded)
    w2_ref: (3, C1, C2)    layer-2 taps
    b2_ref: (1, C2)        layer-2 shift
    o_ref:  (1, L//4, C2)  output
    """
    h = _conv_bn_relu_pool(x_ref[0], w1_ref, b1_ref[...])   # (L//2, C1)
    h = _conv_bn_relu_pool(h, w2_ref, b2_ref[...])          # (L//4, C2)
    o_ref[0] = h.astype(o_ref.dtype)


def cnn_forward(x, params):
    """x: (B, C0, L) float32 (PyTorch NCL) -> (B, C2, L//4)."""
    (w1, b1), (w2, b2) = params
    B, C0, L = x.shape
    assert L % 4 == 0, "sequence length must be divisible by 4 (two MaxPool(2,2))"
    assert w1.shape[1] == C0
    C1 = w1.shape[2]
    C2 = w2.shape[2]

    xt = jnp.transpose(x, (0, 2, 1))                    # (B, L, C0): channels on lanes

    out = pl.pallas_call(
        cnn_kernel,
        out_shape=jax.ShapeDtypeStruct((B, L // 4, C2), jnp.float32),
        grid=(B,),
        in_specs=[
            pl.BlockSpec((1, L, C0), lambda b: (b, 0, 0)),
            pl.BlockSpec((3, C0, C1), lambda b: (0, 0, 0)),
            pl.BlockSpec((1, C1), lambda b: (0, 0)),
            pl.BlockSpec((3, C1, C2), lambda b: (0, 0, 0)),
            pl.BlockSpec((1, C2), lambda b: (0, 0)),
        ],
        out_specs=pl.BlockSpec((1, L // 4, C2), lambda b: (b, 0, 0)),
        compiler_params=pltpu.CompilerParams(dimension_semantics=("parallel",)),
    )(xt, w1, b1, w2, b2)

    # Dropout(0.2): identity in eval mode.
    return jnp.transpose(out, (0, 2, 1))                # back to NCL: (B, C2, L//4)


def make_params(key, channels=(39, 256, 39), ksize=3, eps=1e-5):
    """Deterministic init mirroring the PyTorch module (weight_norm with g=||v||
    at init, BN defaults), with BN scale folded into the conv weights."""
    params = []
    keys = jax.random.split(key, 2 * (len(channels) - 1))
    for i, (cin, cout) in enumerate(zip(channels[:-1], channels[1:])):
        v = 0.1 * jax.random.normal(keys[2 * i], (cout, cin, ksize), jnp.float32)
        norm = jnp.sqrt(jnp.sum(v * v, axis=(1, 2), keepdims=True))
        g = norm                                        # weight_norm init: g = ||v||
        w = g * v / norm                                # (C_out, C_in, 3)
        bias = 0.05 * jax.random.normal(keys[2 * i + 1], (cout,), jnp.float32)

        gamma = jnp.ones((cout,), jnp.float32)
        beta = jnp.zeros((cout,), jnp.float32)
        run_mean = jnp.zeros((cout,), jnp.float32)
        run_var = jnp.ones((cout,), jnp.float32)

        scale = gamma / jnp.sqrt(run_var + eps)         # (C_out,)
        shift = beta + scale * (bias - run_mean)        # conv bias folded into shift
        w_scaled = w * scale[:, None, None]             # BN scale folded into weights
        w_taps = jnp.transpose(w_scaled, (2, 1, 0))     # (3, C_in, C_out)
        params.append((w_taps, shift.reshape(1, cout)))
    return params


def reference(x, params):
    """Pure-JAX reference with identical (folded) math, eval-mode module."""
    out = x
    for (w_taps, shift) in params:
        B, cin, L = out.shape
        cout = w_taps.shape[2]
        xp = jnp.pad(out, ((0, 0), (0, 0), (1, 1)))
        y = jnp.zeros((B, cout, L), jnp.float32)
        for k in range(3):
            y = y + jnp.einsum("co,bcl->bol", w_taps[k], xp[:, :, k:k + L])
        y = jnp.maximum(y + shift.reshape(1, cout, 1), 0.0)
        out = jnp.max(y.reshape(B, cout, L // 2, 2), axis=-1)
    return out


if __name__ == "__main__":
    key = jax.random.PRNGKey(0)
    kx, kp = jax.random.split(key)

    B, L = 2, 32
    channels = (39, 256, 39)
    x = jax.random.normal(kx, (B, channels[0], L), jnp.float32)

    params = make_params(kp, channels)

    out = cnn_forward(x, params)
    out = jax.block_until_ready(out)

    assert out.shape == (B, channels[-1], L // 4), out.shape

    ref = reference(x, params)
    if not jnp.allclose(out, ref, atol=1e-4, rtol=1e-4):
        raise AssertionError("Pallas kernel output does not match reference")

    print("KERNEL_OK")
</pallas_src>

<mosaic_0001>
module attributes {stable_mosaic.version = 11 : i64} {
  func.func @cnn_kernel(%arg0: i32, %arg1: memref<1x32x39xf32, #tpu.memory_space<vmem>>, %arg2: memref<3x39x256xf32, #tpu.memory_space<vmem>>, %arg3: memref<1x256xf32, #tpu.memory_space<vmem>>, %arg4: memref<3x256x39xf32, #tpu.memory_space<vmem>>, %arg5: memref<1x39xf32, #tpu.memory_space<vmem>>, %arg6: memref<1x8x39xf32, #tpu.memory_space<vmem>>) attributes {dimension_semantics = [#tpu.dimension_semantics<parallel>], iteration_bounds = array<i64: 2>, scalar_prefetch = 0 : i64, scratch_operands = 0 : i64, tpu.core_type = #tpu.core_type<tc>, window_params = [{transform_indices = @transform_0, window_bounds = array<i64: 1, 32, 39>}, {pipeline_mode = #tpu.pipeline_mode<synchronous>, transform_indices = @transform_1, window_bounds = array<i64: 3, 39, 256>}, {pipeline_mode = #tpu.pipeline_mode<synchronous>, transform_indices = @transform_2, window_bounds = array<i64: 1, 256>}, {pipeline_mode = #tpu.pipeline_mode<synchronous>, transform_indices = @transform_3, window_bounds = array<i64: 3, 256, 39>}, {pipeline_mode = #tpu.pipeline_mode<synchronous>, transform_indices = @transform_4, window_bounds = array<i64: 1, 39>}, {transform_indices = @transform_5, window_bounds = array<i64: 1, 8, 39>}]} {
    %c0 = arith.constant 0 : index
    %c0_0 = arith.constant 0 : index
    %c0_1 = arith.constant 0 : index
    %0 = vector.load %arg1[%c0, %c0_0, %c0_1] : memref<1x32x39xf32, #tpu.memory_space<vmem>>, vector<1x32x39xf32>
    %1 = vector.shape_cast %0 : vector<1x32x39xf32> to vector<32x39xf32>
    %c0_2 = arith.constant 0 : index
    %c0_3 = arith.constant 0 : index
    %2 = vector.load %arg3[%c0_2, %c0_3] : memref<1x256xf32, #tpu.memory_space<vmem>>, vector<1x256xf32>
    %3 = tpu.iota {dimensions = array<i32: 0>} : vector<32x32xi32>
    %4 = tpu.iota {dimensions = array<i32: 1>} : vector<32x32xi32>
    %c1_i32 = arith.constant 1 : i32
    %5 = vector.broadcast %c1_i32 : i32 to vector<32x32xi32>
    %6 = arith.subi %3, %5 : vector<32x32xi32>
    %7 = arith.cmpi eq, %4, %6 : vector<32x32xi32>
    %8 = arith.extui %7 : vector<32x32xi1> to vector<32x32xi32>
    %9 = arith.sitofp %8 : vector<32x32xi32> to vector<32x32xf32>
    %c1_i32_4 = arith.constant 1 : i32
    %10 = vector.broadcast %c1_i32_4 : i32 to vector<32x32xi32>
    %11 = arith.addi %3, %10 : vector<32x32xi32>
    %12 = arith.cmpi eq, %4, %11 : vector<32x32xi32>
    %13 = arith.extui %12 : vector<32x32xi1> to vector<32x32xi32>
    %14 = arith.sitofp %13 : vector<32x32xi32> to vector<32x32xf32>
    %cst = arith.constant dense<0.000000e+00> : vector<32x39xf32>
    %15 = tpu.matmul %9, %1, %cst {dimension_numbers = #tpu.dot_dimension_numbers<[1], [0], [0], [1], [0, 0, 1, 1], [], []>} : vector<32x32xf32>, vector<32x39xf32>, vector<32x39xf32> -> vector<32x39xf32>
    %cst_5 = arith.constant dense<0.000000e+00> : vector<32x39xf32>
    %16 = tpu.matmul %14, %1, %cst_5 {dimension_numbers = #tpu.dot_dimension_numbers<[1], [0], [0], [1], [0, 0, 1, 1], [], []>} : vector<32x32xf32>, vector<32x39xf32>, vector<32x39xf32> -> vector<32x39xf32>
    %c0_6 = arith.constant 0 : index
    %c0_7 = arith.constant 0 : index
    %c0_8 = arith.constant 0 : index
    %17 = vector.load %arg2[%c0_6, %c0_7, %c0_8] : memref<3x39x256xf32, #tpu.memory_space<vmem>>, vector<1x39x256xf32>
    %18 = vector.shape_cast %17 : vector<1x39x256xf32> to vector<39x256xf32>
    %cst_9 = arith.constant dense<0.000000e+00> : vector<32x256xf32>
    %19 = tpu.matmul %15, %18, %cst_9 {dimension_numbers = #tpu.dot_dimension_numbers<[1], [0], [0], [1], [0, 0, 1, 1], [], []>} : vector<32x39xf32>, vector<39x256xf32>, vector<32x256xf32> -> vector<32x256xf32>
    %c1 = arith.constant 1 : index
    %c0_10 = arith.constant 0 : index
    %c0_11 = arith.constant 0 : index
    %20 = vector.load %arg2[%c1, %c0_10, %c0_11] : memref<3x39x256xf32, #tpu.memory_space<vmem>>, vector<1x39x256xf32>
    %21 = vector.shape_cast %20 : vector<1x39x256xf32> to vector<39x256xf32>
    %cst_12 = arith.constant dense<0.000000e+00> : vector<32x256xf32>
    %22 = tpu.matmul %1, %21, %cst_12 {dimension_numbers = #tpu.dot_dimension_numbers<[1], [0], [0], [1], [0, 0, 1, 1], [], []>} : vector<32x39xf32>, vector<39x256xf32>, vector<32x256xf32> -> vector<32x256xf32>
    %23 = arith.addf %19, %22 : vector<32x256xf32>
    %c2 = arith.constant 2 : index
    %c0_13 = arith.constant 0 : index
    %c0_14 = arith.constant 0 : index
    %24 = vector.load %arg2[%c2, %c0_13, %c0_14] : memref<3x39x256xf32, #tpu.memory_space<vmem>>, vector<1x39x256xf32>
    %25 = vector.shape_cast %24 : vector<1x39x256xf32> to vector<39x256xf32>
    %cst_15 = arith.constant dense<0.000000e+00> : vector<32x256xf32>
    %26 = tpu.matmul %16, %25, %cst_15 {dimension_numbers = #tpu.dot_dimension_numbers<[1], [0], [0], [1], [0, 0, 1, 1], [], []>} : vector<32x39xf32>, vector<39x256xf32>, vector<32x256xf32> -> vector<32x256xf32>
    %27 = arith.addf %23, %26 : vector<32x256xf32>
    %28 = vector.broadcast %2 : vector<1x256xf32> to vector<32x256xf32>
    %29 = arith.addf %27, %28 : vector<32x256xf32>
    %cst_16 = arith.constant 0.000000e+00 : f32
    %30 = vector.broadcast %cst_16 : f32 to vector<32x256xf32>
    %31 = arith.maximumf %29, %30 : vector<32x256xf32>
    %32 = tpu.iota {dimensions = array<i32: 0>} : vector<16x32xi32>
    %33 = tpu.iota {dimensions = array<i32: 1>} : vector<16x32xi32>
    %c2_i32 = arith.constant 2 : i32
    %34 = vector.broadcast %c2_i32 : i32 to vector<16x32xi32>
    %35 = arith.muli %34, %32 : vector<16x32xi32>
    %36 = arith.cmpi eq, %33, %35 : vector<16x32xi32>
    %37 = arith.extui %36 : vector<16x32xi1> to vector<16x32xi32>
    %38 = arith.sitofp %37 : vector<16x32xi32> to vector<16x32xf32>
    %c2_i32_17 = arith.constant 2 : i32
    %39 = vector.broadcast %c2_i32_17 : i32 to vector<16x32xi32>
    %40 = arith.muli %39, %32 : vector<16x32xi32>
    %c1_i32_18 = arith.constant 1 : i32
    %41 = vector.broadcast %c1_i32_18 : i32 to vector<16x32xi32>
    %42 = arith.addi %40, %41 : vector<16x32xi32>
    %43 = arith.cmpi eq, %33, %42 : vector<16x32xi32>
    %44 = arith.extui %43 : vector<16x32xi1> to vector<16x32xi32>
    %45 = arith.sitofp %44 : vector<16x32xi32> to vector<16x32xf32>
    %cst_19 = arith.constant dense<0.000000e+00> : vector<16x256xf32>
    %46 = tpu.matmul %38, %31, %cst_19 {dimension_numbers = #tpu.dot_dimension_numbers<[1], [0], [0], [1], [0, 0, 1, 1], [], []>} : vector<16x32xf32>, vector<32x256xf32>, vector<16x256xf32> -> vector<16x256xf32>
    %cst_20 = arith.constant dense<0.000000e+00> : vector<16x256xf32>
    %47 = tpu.matmul %45, %31, %cst_20 {dimension_numbers = #tpu.dot_dimension_numbers<[1], [0], [0], [1], [0, 0, 1, 1], [], []>} : vector<16x32xf32>, vector<32x256xf32>, vector<16x256xf32> -> vector<16x256xf32>
    %48 = arith.maximumf %46, %47 : vector<16x256xf32>
    %c0_21 = arith.constant 0 : index
    %c0_22 = arith.constant 0 : index
    %49 = vector.load %arg5[%c0_21, %c0_22] : memref<1x39xf32, #tpu.memory_space<vmem>>, vector<1x39xf32>
    %50 = tpu.iota {dimensions = array<i32: 0>} : vector<16x16xi32>
    %51 = tpu.iota {dimensions = array<i32: 1>} : vector<16x16xi32>
    %c1_i32_23 = arith.constant 1 : i32
    %52 = vector.broadcast %c1_i32_23 : i32 to vector<16x16xi32>
    %53 = arith.subi %50, %52 : vector<16x16xi32>
    %54 = arith.cmpi eq, %51, %53 : vector<16x16xi32>
    %55 = arith.extui %54 : vector<16x16xi1> to vector<16x16xi32>
    %56 = arith.sitofp %55 : vector<16x16xi32> to vector<16x16xf32>
    %c1_i32_24 = arith.constant 1 : i32
    %57 = vector.broadcast %c1_i32_24 : i32 to vector<16x16xi32>
    %58 = arith.addi %50, %57 : vector<16x16xi32>
    %59 = arith.cmpi eq, %51, %58 : vector<16x16xi32>
    %60 = arith.extui %59 : vector<16x16xi1> to vector<16x16xi32>
    %61 = arith.sitofp %60 : vector<16x16xi32> to vector<16x16xf32>
    %cst_25 = arith.constant dense<0.000000e+00> : vector<16x256xf32>
    %62 = tpu.matmul %56, %48, %cst_25 {dimension_numbers = #tpu.dot_dimension_numbers<[1], [0], [0], [1], [0, 0, 1, 1], [], []>} : vector<16x16xf32>, vector<16x256xf32>, vector<16x256xf32> -> vector<16x256xf32>
    %cst_26 = arith.constant dense<0.000000e+00> : vector<16x256xf32>
    %63 = tpu.matmul %61, %48, %cst_26 {dimension_numbers = #tpu.dot_dimension_numbers<[1], [0], [0], [1], [0, 0, 1, 1], [], []>} : vector<16x16xf32>, vector<16x256xf32>, vector<16x256xf32> -> vector<16x256xf32>
    %c0_27 = arith.constant 0 : index
    %c0_28 = arith.constant 0 : index
    %c0_29 = arith.constant 0 : index
    %64 = vector.load %arg4[%c0_27, %c0_28, %c0_29] : memref<3x256x39xf32, #tpu.memory_space<vmem>>, vector<1x256x39xf32>
    %65 = vector.shape_cast %64 : vector<1x256x39xf32> to vector<256x39xf32>
    %cst_30 = arith.constant dense<0.000000e+00> : vector<16x39xf32>
    %66 = tpu.matmul %62, %65, %cst_30 {dimension_numbers = #tpu.dot_dimension_numbers<[1], [0], [0], [1], [0, 0, 1, 1], [], []>} : vector<16x256xf32>, vector<256x39xf32>, vector<16x39xf32> -> vector<16x39xf32>
    %c1_31 = arith.constant 1 : index
    %c0_32 = arith.constant 0 : index
    %c0_33 = arith.constant 0 : index
    %67 = vector.load %arg4[%c1_31, %c0_32, %c0_33] : memref<3x256x39xf32, #tpu.memory_space<vmem>>, vector<1x256x39xf32>
    %68 = vector.shape_cast %67 : vector<1x256x39xf32> to vector<256x39xf32>
    %cst_34 = arith.constant dense<0.000000e+00> : vector<16x39xf32>
    %69 = tpu.matmul %48, %68, %cst_34 {dimension_numbers = #tpu.dot_dimension_numbers<[1], [0], [0], [1], [0, 0, 1, 1], [], []>} : vector<16x256xf32>, vector<256x39xf32>, vector<16x39xf32> -> vector<16x39xf32>
    %70 = arith.addf %66, %69 : vector<16x39xf32>
    %c2_35 = arith.constant 2 : index
    %c0_36 = arith.constant 0 : index
    %c0_37 = arith.constant 0 : index
    %71 = vector.load %arg4[%c2_35, %c0_36, %c0_37] : memref<3x256x39xf32, #tpu.memory_space<vmem>>, vector<1x256x39xf32>
    %72 = vector.shape_cast %71 : vector<1x256x39xf32> to vector<256x39xf32>
    %cst_38 = arith.constant dense<0.000000e+00> : vector<16x39xf32>
    %73 = tpu.matmul %63, %72, %cst_38 {dimension_numbers = #tpu.dot_dimension_numbers<[1], [0], [0], [1], [0, 0, 1, 1], [], []>} : vector<16x256xf32>, vector<256x39xf32>, vector<16x39xf32> -> vector<16x39xf32>
    %74 = arith.addf %70, %73 : vector<16x39xf32>
    %75 = vector.broadcast %49 : vector<1x39xf32> to vector<16x39xf32>
    %76 = arith.addf %74, %75 : vector<16x39xf32>
    %cst_39 = arith.constant 0.000000e+00 : f32
    %77 = vector.broadcast %cst_39 : f32 to vector<16x39xf32>
    %78 = arith.maximumf %76, %77 : vector<16x39xf32>
    %79 = tpu.iota {dimensions = array<i32: 0>} : vector<8x16xi32>
    %80 = tpu.iota {dimensions = array<i32: 1>} : vector<8x16xi32>
    %c2_i32_40 = arith.constant 2 : i32
    %81 = vector.broadcast %c2_i32_40 : i32 to vector<8x16xi32>
    %82 = arith.muli %81, %79 : vector<8x16xi32>
    %83 = arith.cmpi eq, %80, %82 : vector<8x16xi32>
    %84 = arith.extui %83 : vector<8x16xi1> to vector<8x16xi32>
    %85 = arith.sitofp %84 : vector<8x16xi32> to vector<8x16xf32>
    %c2_i32_41 = arith.constant 2 : i32
    %86 = vector.broadcast %c2_i32_41 : i32 to vector<8x16xi32>
    %87 = arith.muli %86, %79 : vector<8x16xi32>
    %c1_i32_42 = arith.constant 1 : i32
    %88 = vector.broadcast %c1_i32_42 : i32 to vector<8x16xi32>
    %89 = arith.addi %87, %88 : vector<8x16xi32>
    %90 = arith.cmpi eq, %80, %89 : vector<8x16xi32>
    %91 = arith.extui %90 : vector<8x16xi1> to vector<8x16xi32>
    %92 = arith.sitofp %91 : vector<8x16xi32> to vector<8x16xf32>
    %cst_43 = arith.constant dense<0.000000e+00> : vector<8x39xf32>
    %93 = tpu.matmul %85, %78, %cst_43 {dimension_numbers = #tpu.dot_dimension_numbers<[1], [0], [0], [1], [0, 0, 1, 1], [], []>} : vector<8x16xf32>, vector<16x39xf32>, vector<8x39xf32> -> vector<8x39xf32>
    %cst_44 = arith.constant dense<0.000000e+00> : vector<8x39xf32>
    %94 = tpu.matmul %92, %78, %cst_44 {dimension_numbers = #tpu.dot_dimension_numbers<[1], [0], [0], [1], [0, 0, 1, 1], [], []>} : vector<8x16xf32>, vector<16x39xf32>, vector<8x39xf32> -> vector<8x39xf32>
    %95 = arith.maximumf %93, %94 : vector<8x39xf32>
    %c0_45 = arith.constant 0 : index
    %c0_46 = arith.constant 0 : index
    %c0_47 = arith.constant 0 : index
    %96 = vector.load %arg6[%c0_45, %c0_46, %c0_47] : memref<1x8x39xf32, #tpu.memory_space<vmem>>, vector<1x8x39xf32>
    %97 = vector.shape_cast %96 : vector<1x8x39xf32> to vector<8x39xf32>
    %98 = vector.shape_cast %95 : vector<8x39xf32> to vector<1x8x39xf32>
    tpu.vector_store %arg6[%c0_45, %c0_46, %c0_47], %98 {strides = array<i32>} : memref<1x8x39xf32, #tpu.memory_space<vmem>>, vector<1x8x39xf32>,
    return
  }
  func.func @transform_0(%arg0: i32) -> (i32, i32, i32) {
    %c0_i32 = arith.constant 0 : i32
    %c0_i32_0 = arith.constant 0 : i32
    %c0_i32_1 = arith.constant 0 : i32
    return %arg0, %c0_i32, %c0_i32_0 : i32, i32, i32
  }
  func.func @transform_1(%arg0: i32) -> (i32, i32, i32) {
    %c0_i32 = arith.constant 0 : i32
    %c0_i32_0 = arith.constant 0 : i32
    %c0_i32_1 = arith.constant 0 : i32
    %c0_i32_2 = arith.constant 0 : i32
    return %c0_i32, %c0_i32_0, %c0_i32_1 : i32, i32, i32
  }
  func.func @transform_2(%arg0: i32) -> (i32, i32) {
    %c0_i32 = arith.constant 0 : i32
    %c0_i32_0 = arith.constant 0 : i32
    %c0_i32_1 = arith.constant 0 : i32
    return %c0_i32, %c0_i32_0 : i32, i32
  }
  func.func @transform_3(%arg0: i32) -> (i32, i32, i32) {
    %c0_i32 = arith.constant 0 : i32
    %c0_i32_0 = arith.constant 0 : i32
    %c0_i32_1 = arith.constant 0 : i32
    %c0_i32_2 = arith.constant 0 : i32
    return %c0_i32, %c0_i32_0, %c0_i32_1 : i32, i32, i32
  }
  func.func @transform_4(%arg0: i32) -> (i32, i32) {
    %c0_i32 = arith.constant 0 : i32
    %c0_i32_0 = arith.constant 0 : i32
    %c0_i32_1 = arith.constant 0 : i32
    return %c0_i32, %c0_i32_0 : i32, i32
  }
  func.func @transform_5(%arg0: i32) -> (i32, i32, i32) {
    %c0_i32 = arith.constant 0 : i32
    %c0_i32_0 = arith.constant 0 : i32
    %c0_i32_1 = arith.constant 0 : i32
    return %arg0, %c0_i32, %c0_i32_0 : i32, i32, i32
  }
}

</mosaic_0001>

<llo_original>
// kernel: tpu_custom_call.1
$region0: #{tpu_custom_call.1}
  #allocation0 [shape = 'u32[]', space=smem, size = 0x4, offset = 0x4, fixed_abs, tag = 'smem constant byte address 0x4 - core index']
  #allocation1 [shape = 'u32[144,128]{1,0:T(1,128)}', space=vmem, size = 0x12000, scoped, tag = 'internal scratch']
  %s0 = inlined_call_operand.vmem [shape: f32[2,32,39], index: 0, kind: input, shape index: {}]
  %s1 = inlined_call_operand.vmem [shape: f32[3,39,256], index: 1, kind: input, shape index: {}]
  %s2 = inlined_call_operand.vmem [shape: f32[1,256], index: 2, kind: input, shape index: {}]
  %s3 = inlined_call_operand.vmem [shape: f32[3,256,39], index: 3, kind: input, shape index: {}]
  %s4 = inlined_call_operand.vmem [shape: f32[1,39], index: 4, kind: input, shape index: {}]
  %s5 = inlined_call_operand.hbm [shape: f32[2,8,39], index: 5, kind: output, shape index: {}]
  %s6 = sld [smem:[#allocation0]]
  $region53: #{tpu_custom_call.1} parent=0
    _
  %s8 = ssub.s32 1, %s6
  %s9 = scalar_select 0, %s8, %s6
  $region1: #{tpu_custom_call.1} parent=0
    #allocation2 [shape = 'u8[8192]{0}', space=vmem, size = 0x2000, scoped, tag = 'output window, operand 0']
    #allocation3 [shape = 's32[2]{0}', space=sflag, size = 0x8, scoped, tag = 'scoped memory for tpu_custom_call.1']
    %10 = vsyncpa [#allocation3], 0
    %s11 = scalar_lea.sflag [#allocation3], 1
    %12 = vsyncpa %s11, 0
    loop: start=0, step=1, limit=4
    $region2: #{tpu_custom_call.1} parent=1 // loop_pre_header
      _
    $region3: #{tpu_custom_call.1} parent=1 // loop_header
      %s14 = sphi 0, %s18
      %p15 = scmp.ge.s32.totalorder %s14, 4
      %s24 = sphi 0, %s26
      %s27 = sphi 0, %s24
      %s28 = sphi 0, %s27
      %s44 = sphi 0, %s28
      %s48 = sphi 0, %s48
      %s50 = sphi 0, %s48
      %s51 = sphi 0, %s50
      %s65 = sphi 0, %s51
      %s69 = sphi 0, %s69
      %s71 = sphi 0, %s69
      %s72 = sphi 0, %s71
      %s86 = sphi 0, %s72
      %s90 = sphi 0, %s90
      %s92 = sphi 0, %s90
      %s93 = sphi 0, %s92
      %s107 = sphi 0, %s93
      %s111 = sphi 0, %s111
      %s113 = sphi 0, %s111
      %s114 = sphi 0, %s113
      %s128 = sphi 0, %s114
      %s134 = sphi 0, %s136
      %s137 = sphi 0, %s134
      %s138 = sphi 0, %s137
      %s154 = sphi 0, %s138
    $region4: #{tpu_custom_call.1} parent=1 // loop_header_branch
      %17 = sbr.rel (%p15) target = $region8
    $region5: #{tpu_custom_call.1} parent=1 // loop_body
      %s19 = ssub.s32 %s14, 1
      %s20 = ssub.s32 %s14, 2
      %s21 = sadd.s32 %s14, 1
      %s22 = ssub.s32 %s14, %s21
      %p23 = scmp.eq.s32.totalorder %s22, 0
      %s25 = sadd.s32 %s24, 1
      %s26 = scalar_select %p23, %s24, %s25
      %p29 = pneg %p23
      %p30 = scmp.eq.s32.totalorder %s14, 1
      %p31 = por %p29, %p30
      %p32 = scmp.ne.s32.totalorder %s24, %s27
      %p33 = scmp.eq.s32.totalorder %s14, 0
      %p34 = por %p32, %p33
      %p35 = scmp.ne.s32.totalorder %s24, %s27
      %p36 = scmp.eq.s32.totalorder %s19, 1
      %p37 = por %p35, %p36
      %p38 = scmp.ne.s32.totalorder %s27, %s28
      %p39 = scmp.eq.s32.totalorder %s19, 0
      %p40 = por %p38, %p39
      %p41 = scmp.ne.s32.totalorder %s27, %s28
      %p42 = scmp.eq.s32.totalorder %s20, 1
      %p43 = por %p41, %p42
      %p45 = scmp.ne.s32.totalorder %s28, %s44
      %p46 = scmp.eq.s32.totalorder %s20, 0
      %p47 = por %p45, %p46
      %s49 = sadd.s32 %s48, 1
      %p52 = scmp.eq.s32.totalorder %s14, 1
      %p53 = scmp.ne.s32.totalorder %s48, %s50
      %p54 = scmp.eq.s32.totalorder %s14, 0
      %p55 = por %p53, %p54
      %p56 = scmp.ne.s32.totalorder %s48, %s50
      %p57 = scmp.eq.s32.totalorder %s19, 1
      %p58 = por %p56, %p57
      %p59 = scmp.ne.s32.totalorder %s50, %s51
      %p60 = scmp.eq.s32.totalorder %s19, 0
      %p61 = por %p59, %p60
      %p62 = scmp.ne.s32.totalorder %s50, %s51
      %p63 = scmp.eq.s32.totalorder %s20, 1
      %p64 = por %p62, %p63
      %p66 = scmp.ne.s32.totalorder %s51, %s65
      %p67 = scmp.eq.s32.totalorder %s20, 0
      %p68 = por %p66, %p67
      %s70 = sadd.s32 %s69, 1
      %p73 = scmp.eq.s32.totalorder %s14, 1
      %p74 = scmp.ne.s32.totalorder %s69, %s71
      %p75 = scmp.eq.s32.totalorder %s14, 0
      %p76 = por %p74, %p75
      %p77 = scmp.ne.s32.totalorder %s69, %s71
      %p78 = scmp.eq.s32.totalorder %s19, 1
      %p79 = por %p77, %p78
      %p80 = scmp.ne.s32.totalorder %s71, %s72
      %p81 = scmp.eq.s32.totalorder %s19, 0
      %p82 = por %p80, %p81
      %p83 = scmp.ne.s32.totalorder %s71, %s72
      %p84 = scmp.eq.s32.totalorder %s20, 1
      %p85 = por %p83, %p84
      %p87 = scmp.ne.s32.totalorder %s72, %s86
      %p88 = scmp.eq.s32.totalorder %s20, 0
      %p89 = por %p87, %p88
      %s91 = sadd.s32 %s90, 1
      %p94 = scmp.eq.s32.totalorder %s14, 1
      %p95 = scmp.ne.s32.totalorder %s90, %s92
      %p96 = scmp.eq.s32.totalorder %s14, 0
      %p97 = por %p95, %p96
      %p98 = scmp.ne.s32.totalorder %s90, %s92
      %p99 = scmp.eq.s32.totalorder %s19, 1
      %p100 = por %p98, %p99
      %p101 = scmp.ne.s32.totalorder %s92, %s93
      %p102 = scmp.eq.s32.totalorder %s19, 0
      %p103 = por %p101, %p102
      %p104 = scmp.ne.s32.totalorder %s92, %s93
      %p105 = scmp.eq.s32.totalorder %s20, 1
      %p106 = por %p104, %p105
      %p108 = scmp.ne.s32.totalorder %s93, %s107
      %p109 = scmp.eq.s32.totalorder %s20, 0
      %p110 = por %p108, %p109
      %s112 = sadd.s32 %s111, 1
      %p115 = scmp.eq.s32.totalorder %s14, 1
      %p116 = scmp.ne.s32.totalorder %s111, %s113
      %p117 = scmp.eq.s32.totalorder %s14, 0
      %p118 = por %p116, %p117
      %p119 = scmp.ne.s32.totalorder %s111, %s113
      %p120 = scmp.eq.s32.totalorder %s19, 1
      %p121 = por %p119, %p120
      %p122 = scmp.ne.s32.totalorder %s113, %s114
      %p123 = scmp.eq.s32.totalorder %s19, 0
      %p124 = por %p122, %p123
      %p125 = scmp.ne.s32.totalorder %s113, %s114
      %p126 = scmp.eq.s32.totalorder %s20, 1
      %p127 = por %p125, %p126
      %p129 = scmp.ne.s32.totalorder %s114, %s128
      %p130 = scmp.eq.s32.totalorder %s20, 0
      %p131 = por %p129, %p130
      %s132 = ssub.s32 %s14, %s21
      %p133 = scmp.eq.s32.totalorder %s132, 0
      %s135 = sadd.s32 %s134, 1
      %s136 = scalar_select %p133, %s134, %s135
      %p139 = pneg %p133
      %p140 = scmp.eq.s32.totalorder %s14, 1
      %p141 = por %p139, %p140
      %p142 = scmp.ne.s32.totalorder %s134, %s137
      %p143 = scmp.eq.s32.totalorder %s14, 0
      %p144 = por %p142, %p143
      %p145 = scmp.ne.s32.totalorder %s134, %s137
      %p146 = scmp.eq.s32.totalorder %s19, 1
      %p147 = por %p145, %p146
      %p148 = scmp.ne.s32.totalorder %s137, %s138
      %p149 = scmp.eq.s32.totalorder %s19, 0
      %p150 = por %p148, %p149
      %p151 = scmp.ne.s32.totalorder %s137, %s138
      %p152 = scmp.eq.s32.totalorder %s20, 1
      %p153 = por %p151, %p152
      %p155 = scmp.ne.s32.totalorder %s138, %s154
      %p156 = scmp.eq.s32.totalorder %s20, 0
      %p157 = por %p155, %p156
      %p158 = scmp.le.s32.totalorder 1, %s14
      %p159 = scmp.lt.s32.totalorder %s14, 3
      %p160 = pnand %p158, %p159
      %p161 = pneg %p160
      // Predicated region
      $region9: #{tpu_custom_call.1} parent=5 // pred_check
        _
      $region10: #{tpu_custom_call.1} parent=5 // pred_check_branch
        %163 = sbr.rel (%p160) target = $region12
      $region11: #{tpu_custom_call.1} parent=5 // pred_region
        %s164 = ssub.s32 %s14, 1
        // Predicated region
        $region13: #{tpu_custom_call.1} parent=11 // pred_check
          %p165 = pneg %p61
        $region14: #{tpu_custom_call.1} parent=11 // pred_check_branch
          %167 = sbr.rel (%p165) target = $region16
        $region15: #{tpu_custom_call.1} parent=11 // pred_region
          _
        $region16: #{tpu_custom_call.1} parent=11 // pred_fallthru
          _
        // Predicated region
        $region17: #{tpu_custom_call.1} parent=11 // pred_check
          %p168 = pneg %p82
        $region18: #{tpu_custom_call.1} parent=11 // pred_check_branch
          %170 = sbr.rel (%p168) target = $region20
        $region19: #{tpu_custom_call.1} parent=11 // pred_region
          _
        $region20: #{tpu_custom_call.1} parent=11 // pred_fallthru
          _
        // Predicated region
        $region21: #{tpu_custom_call.1} parent=11 // pred_check
          %p171 = pneg %p103
        $region22: #{tpu_custom_call.1} parent=11 // pred_check_branch
          %173 = sbr.rel (%p171) target = $region24
        $region23: #{tpu_custom_call.1} parent=11 // pred_region
          _
        $region24: #{tpu_custom_call.1} parent=11 // pred_fallthru
          _
        // Predicated region
        $region25: #{tpu_custom_call.1} parent=11 // pred_check
          %p174 = pneg %p124
        $region26: #{tpu_custom_call.1} parent=11 // pred_check_branch
          %176 = sbr.rel (%p174) target = $region28
        $region27: #{tpu_custom_call.1} parent=11 // pred_region
          _
        $region28: #{tpu_custom_call.1} parent=11 // pred_fallthru
          _
      $region12: #{tpu_custom_call.1} parent=5 // pred_fallthru
        _
      %p177 = scmp.lt.s32.totalorder %s14, 2
      // Predicated region
      $region29: #{tpu_custom_call.1} parent=5 // pred_check
        %p178 = pneg %p177
      $region30: #{tpu_custom_call.1} parent=5 // pred_check_branch
        %180 = sbr.rel (%p178) target = $region32
      $region31: #{tpu_custom_call.1} parent=5 // pred_region
        // Predicated region
        $region33: #{tpu_custom_call.1} parent=31 // pred_check
          %p181 = pneg %p34
        $region34: #{tpu_custom_call.1} parent=31 // pred_check_branch
          %183 = sbr.rel (%p181) target = $region36
        $region35: #{tpu_custom_call.1} parent=31 // pred_region
          %p184 = scmp.lt.s32.totalorder %s14, 1
          %s185 = scalar_select %p184, %s14, 1
          %s186 = smul.addr %s185, 4
          %s187 = smul.addr %s186, 8
          %s188 = scalar_lea.vmem %s0, %s187
        $region36: #{tpu_custom_call.1} parent=31 // pred_fallthru
          _
      $region32: #{tpu_custom_call.1} parent=5 // pred_fallthru
        _
      %p189 = scmp.le.s32.totalorder 1, %s14
      %p190 = scmp.lt.s32.totalorder %s14, 3
      %p191 = pnand %p189, %p190
      %p192 = pneg %p191
      // Predicated region
      $region37: #{tpu_custom_call.1} parent=5 // pred_check
        _
      $region38: #{tpu_custom_call.1} parent=5 // pred_check_branch
        %194 = sbr.rel (%p191) target = $region40
      $region39: #{tpu_custom_call.1} parent=5 // pred_region
        %s195 = ssub.s32 %s14, 1
        %p196 = scmp.lt.s32.totalorder %s19, 1
        %s197 = scalar_select %p196, %s19, 1
        %s198 = smul.addr %s197, 4
        %s199 = smul.addr %s198, 8
        %s200 = scalar_lea.vmem %s0, %s199
        %p201 = pneg %p40
        %p202 = pneg %p37
        %p203 = pneg %p61
        %p204 = pneg %p58
        %p205 = pneg %p82
        %p206 = pneg %p79
        %p207 = pneg %p103
        %p208 = pneg %p100
        %p209 = pneg %p124
        %p210 = pneg %p121
        %p211 = pneg %p150
        %p212 = pneg %p147
        %s213 = sand.u32 %s137, 1
        %s214 = scalar_lea.sflag [#allocation3], %s213
        %s215 = sand.u32 %s137, 1
        %s216 = smul.addr %s215, 8
        %s217 = scalar_lea.vmem [#allocation2], %s216
        %p218 = scmp.lt.s32.totalorder %s19, 1
        %s219 = scalar_select %p218, %s19, 1
        %s220 = smul.addr %s219, 4
        %s221 = smul.addr %s220, 8
        %s222 = scalar_lea.vmem %s0, %s221
        %v223 = vld [vmem:[%s222] sm:$0xff]
        %v224 = vld [vmem:[%s222 + $0x8] sm:$0xff]
        %v225 = vld [vmem:[%s222 + $0x10] sm:$0xff]
        %v226 = vld [vmem:[%s222 + $0x18] sm:$0xff]
        %v227 = vld [vmem:[%s2] sm:$0x3]
        %v228 = vlaneseq
        %v229 = vshrl.u32 %v228, 7
        %v230 = vadd.s32 %v229, 8
        %v231 = vadd.s32 %v229, 16
        %v232 = vadd.s32 %v229, 24
        %v233 = vlaneseq
        %v234 = vand.u32 %v233, 127
        %v235 = vsub.s32 %v229, 1
        %v236 = vsub.s32 %v230, 1
        %v237 = vsub.s32 %v231, 1
        %v238 = vsub.s32 %v232, 1
        %vm239 = vcmp.eq.s32.totalorder %v234, %v235
        %vm240 = vcmp.eq.s32.totalorder %v234, %v236
        %vm241 = vcmp.eq.s32.totalorder %v234, %v237
        %vm242 = vcmp.eq.s32.totalorder %v234, %v238
        %v243 = vsel %vm239, 1, 0
        %v244 = vsel %vm240, 1, 0
        %v245 = vsel %vm241, 1, 0
        %v246 = vsel %vm242, 1, 0
        %v247 = vcvt.s32.f32 %v243
        %v248 = vcvt.s32.f32 %v244
        %v249 = vcvt.s32.f32 %v245
        %v250 = vcvt.s32.f32 %v246
        %v251 = vadd.s32 %v229, 1
        %v252 = vadd.s32 %v230, 1
        %v253 = vadd.s32 %v231, 1
        %v254 = vadd.s32 %v232, 1
        %vm255 = vcmp.eq.s32.totalorder %v234, %v251
        %vm256 = vcmp.eq.s32.totalorder %v234, %v252
        %vm257 = vcmp.eq.s32.totalorder %v234, %v253
        %vm258 = vcmp.eq.s32.totalorder %v234, %v254
        %v259 = vsel %vm255, 1, 0
        %v260 = vsel %vm256, 1, 0
        %v261 = vsel %vm257, 1, 0
        %v262 = vsel %vm258, 1, 0
        %v263 = vcvt.s32.f32 %v259
        %v264 = vcvt.s32.f32 %v260
        %v265 = vcvt.s32.f32 %v261
        %v266 = vcvt.s32.f32 %v262
        %vm267 = vcmask 261120
        %v269 = vsel %vm267, %v247, 0
        %v272 = vsel %vm267, %v248, 0
        %v275 = vsel %vm267, %v249, 0
        %v278 = vsel %vm267, %v250, 0
        %280 = vmatprep.subr.mxu0 0.0
        %281 = vmatpush1.msra.mxu0 %v223
        %282 = vmatprep.subr.mxu0 0.0
        %283 = vmatpush1.msra.mxu0 %v224
        %284 = vmatprep.subr.mxu0 0.0
        %285 = vmatpush1.msra.mxu0 %v225
        %286 = vmatprep.subr.mxu0 0.0
        %287 = vmatpush1.msra.mxu0 %v226
        %288 = vmatprep.subr.mxu0 0.0
        %289 = vmatpush1.msra.mxu0 0.0
        %290 = vmatprep.subr.mxu0 0.0
        %291 = vmatpush1.msra.mxu0 0.0
        %292 = vmatprep.subr.mxu0 0.0
        %293 = vmatpush1.msra.mxu0 0.0
        %294 = vmatprep.subr.mxu0 0.0
        %295 = vmatpush1.msra.mxu0 0.0
        %296 = vmatprep.subr.mxu0 0.0
        %297 = vmatpush1.msra.mxu0 0.0
        %298 = vmatprep.subr.mxu0 0.0
        %299 = vmatpush1.msra.mxu0 0.0
        %300 = vmatprep.subr.mxu0 0.0
        %301 = vmatpush1.msra.mxu0 0.0
        %302 = vmatprep.subr.mxu0 0.0
        %303 = vmatpush1.msra.mxu0 0.0
        %304 = vmatprep.subr.mxu0 0.0
        %305 = vmatpush1.msra.mxu0 0.0
        %306 = vmatprep.subr.mxu0 0.0
        %307 = vmatpush1.msra.mxu0 0.0
        %308 = vmatprep.subr.mxu0 0.0
        %309 = vmatpush1.msra.mxu0 0.0
        %310 = vmatprep.subr.mxu0 0.0
        %311 = vmatpush1.msra.mxu0 0.0
        %312 = vmatprep.subr.mxu0 0.0
        %313 = vmatpush1.msra.mxu0 0.0
        %314 = vmatprep.subr.mxu0 0.0
        %315 = vmatpush1.msra.mxu0 0.0
        %316 = vmatprep.subr.mxu0 0.0
        %317 = vmatpush1.msra.mxu0 0.0
        %318 = vmatprep.subr.mxu0 0.0
        %319 = vmatpush1.msra.mxu0 0.0
        %320 = vmatprep.subr.mxu0 0.0
        %321 = vmatpush1.msra.mxu0 0.0
        %322 = vmatprep.subr.mxu0 0.0
        %323 = vmatpush1.msra.mxu0 0.0
        %324 = vmatprep.subr.mxu0 0.0
        %325 = vmatpush1.msra.mxu0 0.0
        %326 = vmatprep.subr.mxu0 0.0
        %327 = vmatpush1.msra.mxu0 0.0
        %328 = vmatprep.subr.mxu0 0.0
        %329 = vmatpush1.msra.mxu0 0.0
        %330 = vmatprep.subr.mxu0 0.0
        %331 = vmatpush1.msra.mxu0 0.0
        %332 = vmatprep.subr.mxu0 0.0
        %333 = vmatpush1.msra.mxu0 0.0
        %334 = vmatprep.subr.mxu0 0.0
        %335 = vmatpush1.msra.mxu0 0.0
        %336 = vmatprep.subr.mxu0 0.0
        %337 = vmatpush1.msra.mxu0 0.0
        %338 = vmatprep.subr.mxu0 0.0
        %339 = vmatpush1.msra.mxu0 0.0
        %340 = vmatprep.subr.mxu0 0.0
        %341 = vmatpush1.msra.mxu0 0.0
        %342 = vmatprep.subr.mxu0 0.0
        %343 = vmatpush1.msra.mxu0 0.0
        %344 = vmatprep.mubr.f32.mxu0 0.0
        %345 = vmatmul.mubr.f32.gmra.mrb[0].mxu0 %v269
        %v346 = vpop.f32.mrb[0].mxu0
        %v347 = vadd.f32 0.0, %v346
        %v348 = vpop.f32.mrb[0].mxu0
        %349 = vmatprep.mubr.f32.mxu0 0.0
        %350 = vmatmul.mubr.f32.gmra.mrb[0].mxu0 %v272
        %v351 = vpop.f32.mrb[0].mxu0
        %v352 = vadd.f32 0.0, %v351
        %v353 = vpop.f32.mrb[0].mxu0
        %354 = vmatprep.mubr.f32.mxu0 0.0
        %355 = vmatmul.mubr.f32.gmra.mrb[0].mxu0 %v275
        %v356 = vpop.f32.mrb[0].mxu0
        %v357 = vadd.f32 0.0, %v356
        %v358 = vpop.f32.mrb[0].mxu0
        %359 = vmatprep.mubr.f32.mxu0 0.0
        %360 = vmatmul.mubr.f32.gmra.mrb[0].mxu0 %v278
        %v361 = vpop.f32.mrb[0].mxu0
        %v362 = vadd.f32 0.0, %v361
        %v363 = vpop.f32.mrb[0].mxu0
        %364 = vdwg.mxu0
        %v366 = vsel %vm267, %v263, 0
        %v369 = vsel %vm267, %v264, 0
        %v372 = vsel %vm267, %v265, 0
        %v375 = vsel %vm267, %v266, 0
        %377 = vmatprep.subr.mxu0 0.0
        %378 = vmatpush1.msra.mxu0 %v223
        %379 = vmatprep.subr.mxu0 0.0
        %380 = vmatpush1.msra.mxu0 %v224
        %381 = vmatprep.subr.mxu0 0.0
        %382 = vmatpush1.msra.mxu0 %v225
        %383 = vmatprep.subr.mxu0 0.0
        %384 = vmatpush1.msra.mxu0 %v226
        %385 = vmatprep.subr.mxu0 0.0
        %386 = vmatpush1.msra.mxu0 0.0
        %387 = vmatprep.subr.mxu0 0.0
        %388 = vmatpush1.msra.mxu0 0.0
        %389 = vmatprep.subr.mxu0 0.0
        %390 = vmatpush1.msra.mxu0 0.0
        %391 = vmatprep.subr.mxu0 0.0
        %392 = vmatpush1.msra.mxu0 0.0
        %393 = vmatprep.subr.mxu0 0.0
        %394 = vmatpush1.msra.mxu0 0.0
        %395 = vmatprep.subr.mxu0 0.0
        %396 = vmatpush1.msra.mxu0 0.0
        %397 = vmatprep.subr.mxu0 0.0
        %398 = vmatpush1.msra.mxu0 0.0
        %399 = vmatprep.subr.mxu0 0.0
        %400 = vmatpush1.msra.mxu0 0.0
        %401 = vmatprep.subr.mxu0 0.0
        %402 = vmatpush1.msra.mxu0 0.0
        %403 = vmatprep.subr.mxu0 0.0
        %404 = vmatpush1.msra.mxu0 0.0
        %405 = vmatprep.subr.mxu0 0.0
        %406 = vmatpush1.msra.mxu0 0.0
        %407 = vmatprep.subr.mxu0 0.0
        %408 = vmatpush1.msra.mxu0 0.0
        %409 = vmatprep.subr.mxu0 0.0
        %410 = vmatpush1.msra.mxu0 0.0
        %411 = vmatprep.subr.mxu0 0.0
        %412 = vmatpush1.msra.mxu0 0.0
        %413 = vmatprep.subr.mxu0 0.0
        %414 = vmatpush1.msra.mxu0 0.0
        %415 = vmatprep.subr.mxu0 0.0
        %416 = vmatpush1.msra.mxu0 0.0
        %417 = vmatprep.subr.mxu0 0.0
        %418 = vmatpush1.msra.mxu0 0.0
        %419 = vmatprep.subr.mxu0 0.0
        %420 = vmatpush1.msra.mxu0 0.0
        %421 = vmatprep.subr.mxu0 0.0
        %422 = vmatpush1.msra.mxu0 0.0
        %423 = vmatprep.subr.mxu0 0.0
        %424 = vmatpush1.msra.mxu0 0.0
        %425 = vmatprep.subr.mxu0 0.0
        %426 = vmatpush1.msra.mxu0 0.0
        %427 = vmatprep.subr.mxu0 0.0
        %428 = vmatpush1.msra.mxu0 0.0
        %429 = vmatprep.subr.mxu0 0.0
        %430 = vmatpush1.msra.mxu0 0.0
        %431 = vmatprep.subr.mxu0 0.0
        %432 = vmatpush1.msra.mxu0 0.0
        %433 = vmatprep.subr.mxu0 0.0
        %434 = vmatpush1.msra.mxu0 0.0
        %435 = vmatprep.subr.mxu0 0.0
        %436 = vmatpush1.msra.mxu0 0.0
        %437 = vmatprep.subr.mxu0 0.0
        %438 = vmatpush1.msra.mxu0 0.0
        %439 = vmatprep.subr.mxu0 0.0
        %440 = vmatpush1.msra.mxu0 0.0
        %441 = vmatprep.mubr.f32.mxu0 0.0
        %442 = vmatmul.mubr.f32.gmra.mrb[0].mxu0 %v366
        %v443 = vpop.f32.mrb[0].mxu0
        %v444 = vadd.f32 0.0, %v443
        %v445 = vpop.f32.mrb[0].mxu0
        %446 = vmatprep.mubr.f32.mxu0 0.0
        %447 = vmatmul.mubr.f32.gmra.mrb[0].mxu0 %v369
        %v448 = vpop.f32.mrb[0].mxu0
        %v449 = vadd.f32 0.0, %v448
        %v450 = vpop.f32.mrb[0].mxu0
        %451 = vmatprep.mubr.f32.mxu0 0.0
        %452 = vmatmul.mubr.f32.gmra.mrb[0].mxu0 %v372
        %v453 = vpop.f32.mrb[0].mxu0
        %v454 = vadd.f32 0.0, %v453
        %v455 = vpop.f32.mrb[0].mxu0
        %456 = vmatprep.mubr.f32.mxu0 0.0
        %457 = vmatmul.mubr.f32.gmra.mrb[0].mxu0 %v375
        %v458 = vpop.f32.mrb[0].mxu0
        %v459 = vadd.f32 0.0, %v458
        %v460 = vpop.f32.mrb[0].mxu0
        %461 = vdwg.mxu0
        %v462 = vld [vmem:[%s1] sm:$0xff]
        %v463 = vld [vmem:[%s1 + $0x8] sm:$0xff]
        %v464 = vld [vmem:[%s1 + $0x10] sm:$0xff]
        %v465 = vld [vmem:[%s1 + $0x18] sm:$0xff]
        %v466 = vld [vmem:[%s1 + $0x20] sm:$0xff]
        %v467 = vld [vmem:[%s1 + $0x28] sm:$0xff]
        %v468 = vld [vmem:[%s1 + $0x30] sm:$0xff]
        %v469 = vld [vmem:[%s1 + $0x38] sm:$0xff]
        %v470 = vld [vmem:[%s1 + $0x40] sm:$0x7f]
        %v471 = vld [vmem:[%s1 + $0x48] sm:$0x7f]
        %s472 = scalar_lea.vmem %s1, 80
        %v473 = vld [vmem:[%s472] sm:$0xff]
        %v474 = vld [vmem:[%s472 + $0x8] sm:$0xff]
        %v475 = vld [vmem:[%s472 + $0x10] sm:$0xff]
        %v476 = vld [vmem:[%s472 + $0x18] sm:$0xff]
        %v477 = vld [vmem:[%s472 + $0x20] sm:$0xff]
        %v478 = vld [vmem:[%s472 + $0x28] sm:$0xff]
        %v479 = vld [vmem:[%s472 + $0x30] sm:$0xff]
        %v480 = vld [vmem:[%s472 + $0x38] sm:$0xff]
        %v481 = vld [vmem:[%s472 + $0x40] sm:$0x7f]
        %v482 = vld [vmem:[%s472 + $0x48] sm:$0x7f]
        %vm483 = vcmask 318464
        %v485 = vsel %vm483, %v223, 0
        %v488 = vsel %vm483, %v224, 0
        %v491 = vsel %vm483, %v225, 0
        %v494 = vsel %vm483, %v226, 0
        %vm496 = vcmask 1046528
        %v498 = vsel %vm496, %v481, 0
        %v501 = vsel %vm496, %v482, 0
        %503 = vmatprep.subr.mxu0 %v474
        %504 = vmatpush1.msra.mxu0 %v473
        %505 = vmatprep.subr.mxu0 %v476
        %506 = vmatpush1.msra.mxu0 %v475
        %507 = vmatprep.subr.mxu0 %v478
        %508 = vmatpush1.msra.mxu0 %v477
        %509 = vmatprep.subr.mxu0 %v480
        %510 = vmatpush1.msra.mxu0 %v479
        %511 = vmatprep.subr.mxu0 %v501
        %512 = vmatpush1.msra.mxu0 %v498
        %513 = vmatprep.subr.mxu0 0.0
        %514 = vmatpush1.msra.mxu0 0.0
        %515 = vmatprep.subr.mxu0 0.0
        %516 = vmatpush1.msra.mxu0 0.0
        %517 = vmatprep.subr.mxu0 0.0
        %518 = vmatpush1.msra.mxu0 0.0
        %519 = vmatprep.subr.mxu0 0.0
        %520 = vmatpush1.msra.mxu0 0.0
        %521 = vmatprep.subr.mxu0 0.0
        %522 = vmatpush1.msra.mxu0 0.0
        %523 = vmatprep.subr.mxu0 0.0
        %524 = vmatpush1.msra.mxu0 0.0
        %525 = vmatprep.subr.mxu0 0.0
        %526 = vmatpush1.msra.mxu0 0.0
        %527 = vmatprep.subr.mxu0 0.0
        %528 = vmatpush1.msra.mxu0 0.0
        %529 = vmatprep.subr.mxu0 0.0
        %530 = vmatpush1.msra.mxu0 0.0
        %531 = vmatprep.subr.mxu0 0.0
        %532 = vmatpush1.msra.mxu0 0.0
        %533 = vmatprep.subr.mxu0 0.0
        %534 = vmatpush1.msra.mxu0 0.0
        %535 = vmatprep.subr.mxu0 0.0
        %536 = vmatpush1.msra.mxu0 0.0
        %537 = vmatprep.subr.mxu0 0.0
        %538 = vmatpush1.msra.mxu0 0.0
        %539 = vmatprep.subr.mxu0 0.0
        %540 = vmatpush1.msra.mxu0 0.0
        %541 = vmatprep.subr.mxu0 0.0
        %542 = vmatpush1.msra.mxu0 0.0
        %543 = vmatprep.subr.mxu0 0.0
        %544 = vmatpush1.msra.mxu0 0.0
        %545 = vmatprep.subr.mxu0 0.0
        %546 = vmatpush1.msra.mxu0 0.0
        %547 = vmatprep.subr.mxu0 0.0
        %548 = vmatpush1.msra.mxu0 0.0
        %549 = vmatprep.subr.mxu0 0.0
        %550 = vmatpush1.msra.mxu0 0.0
        %551 = vmatprep.subr.mxu0 0.0
        %552 = vmatpush1.msra.mxu0 0.0
        %553 = vmatprep.subr.mxu0 0.0
        %554 = vmatpush1.msra.mxu0 0.0
        %555 = vmatprep.subr.mxu0 0.0
        %556 = vmatpush1.msra.mxu0 0.0
        %557 = vmatprep.subr.mxu0 0.0
        %558 = vmatpush1.msra.mxu0 0.0
        %559 = vmatprep.subr.mxu0 0.0
        %560 = vmatpush1.msra.mxu0 0.0
        %561 = vmatprep.subr.mxu0 0.0
        %562 = vmatpush1.msra.mxu0 0.0
        %563 = vmatprep.subr.mxu0 0.0
        %564 = vmatpush1.msra.mxu0 0.0
        %565 = vmatprep.subr.mxu0 0.0
        %566 = vmatpush1.msra.mxu0 0.0
        %567 = vmatprep.mubr.f32.mxu0 0.0
        %568 = vmatmul.mubr.f32.gmra.mrb[0].mxu0 %v485
        %v569 = vpop.f32.mrb[0].mxu0
        %v570 = vadd.f32 0.0, %v569
        %v571 = vpop.f32.mrb[0].mxu0
        %v572 = vadd.f32 0.0, %v571
        %573 = vmatprep.mubr.f32.mxu0 0.0
        %574 = vmatmul.mubr.f32.gmra.mrb[0].mxu0 %v488
        %v575 = vpop.f32.mrb[0].mxu0
        %v576 = vadd.f32 0.0, %v575
        %v577 = vpop.f32.mrb[0].mxu0
        %v578 = vadd.f32 0.0, %v577
        %579 = vmatprep.mubr.f32.mxu0 0.0
        %580 = vmatmul.mubr.f32.gmra.mrb[0].mxu0 %v491
        %v581 = vpop.f32.mrb[0].mxu0
        %v582 = vadd.f32 0.0, %v581
        %v583 = vpop.f32.mrb[0].mxu0
        %v584 = vadd.f32 0.0, %v583
        %585 = vmatprep.mubr.f32.mxu0 0.0
        %586 = vmatmul.mubr.f32.gmra.mrb[0].mxu0 %v494
        %v587 = vpop.f32.mrb[0].mxu0
        %v588 = vadd.f32 0.0, %v587
        %v589 = vpop.f32.mrb[0].mxu0
        %v590 = vadd.f32 0.0, %v589
        %591 = vdwg.mxu0
        %v593 = vsel %vm483, %v347, 0
        %v596 = vsel %vm483, %v352, 0
        %v599 = vsel %vm483, %v357, 0
        %v602 = vsel %vm483, %v362, 0
        %v605 = vsel %vm496, %v470, 0
        %v608 = vsel %vm496, %v471, 0
        %610 = vmatprep.subr.mxu0 %v463
        %611 = vmatpush1.msra.mxu0 %v462
        %612 = vmatprep.subr.mxu0 %v465
        %613 = vmatpush1.msra.mxu0 %v464
        %614 = vmatprep.subr.mxu0 %v467
        %615 = vmatpush1.msra.mxu0 %v466
        %616 = vmatprep.subr.mxu0 %v469
        %617 = vmatpush1.msra.mxu0 %v468
        %618 = vmatprep.subr.mxu0 %v608
        %619 = vmatpush1.msra.mxu0 %v605
        %620 = vmatprep.subr.mxu0 0.0
        %621 = vmatpush1.msra.mxu0 0.0
        %622 = vmatprep.subr.mxu0 0.0
        %623 = vmatpush1.msra.mxu0 0.0
        %624 = vmatprep.subr.mxu0 0.0
        %625 = vmatpush1.msra.mxu0 0.0
        %626 = vmatprep.subr.mxu0 0.0
        %627 = vmatpush1.msra.mxu0 0.0
        %628 = vmatprep.subr.mxu0 0.0
        %629 = vmatpush1.msra.mxu0 0.0
        %630 = vmatprep.subr.mxu0 0.0
        %631 = vmatpush1.msra.mxu0 0.0
        %632 = vmatprep.subr.mxu0 0.0
        %633 = vmatpush1.msra.mxu0 0.0
        %634 = vmatprep.subr.mxu0 0.0
        %635 = vmatpush1.msra.mxu0 0.0
        %636 = vmatprep.subr.mxu0 0.0
        %637 = vmatpush1.msra.mxu0 0.0
        %638 = vmatprep.subr.mxu0 0.0
        %639 = vmatpush1.msra.mxu0 0.0
        %640 = vmatprep.subr.mxu0 0.0
        %641 = vmatpush1.msra.mxu0 0.0
        %642 = vmatprep.subr.mxu0 0.0
        %643 = vmatpush1.msra.mxu0 0.0
        %644 = vmatprep.subr.mxu0 0.0
        %645 = vmatpush1.msra.mxu0 0.0
        %646 = vmatprep.subr.mxu0 0.0
        %647 = vmatpush1.msra.mxu0 0.0
        %648 = vmatprep.subr.mxu0 0.0
        %649 = vmatpush1.msra.mxu0 0.0
        %650 = vmatprep.subr.mxu0 0.0
        %651 = vmatpush1.msra.mxu0 0.0
        %652 = vmatprep.subr.mxu0 0.0
        %653 = vmatpush1.msra.mxu0 0.0
        %654 = vmatprep.subr.mxu0 0.0
        %655 = vmatpush1.msra.mxu0 0.0
        %656 = vmatprep.subr.mxu0 0.0
        %657 = vmatpush1.msra.mxu0 0.0
        %658 = vmatprep.subr.mxu0 0.0
        %659 = vmatpush1.msra.mxu0 0.0
        %660 = vmatprep.subr.mxu0 0.0
        %661 = vmatpush1.msra.mxu0 0.0
        %662 = vmatprep.subr.mxu0 0.0
        %663 = vmatpush1.msra.mxu0 0.0
        %664 = vmatprep.subr.mxu0 0.0
        %665 = vmatpush1.msra.mxu0 0.0
        %666 = vmatprep.subr.mxu0 0.0
        %667 = vmatpush1.msra.mxu0 0.0
        %668 = vmatprep.subr.mxu0 0.0
        %669 = vmatpush1.msra.mxu0 0.0
        %670 = vmatprep.subr.mxu0 0.0
        %671 = vmatpush1.msra.mxu0 0.0
        %672 = vmatprep.subr.mxu0 0.0
        %673 = vmatpush1.msra.mxu0 0.0
        %674 = vmatprep.mubr.f32.mxu0 0.0
        %675 = vmatmul.mubr.f32.gmra.mrb[0].mxu0 %v593
        %v676 = vpop.f32.mrb[0].mxu0
        %v677 = vadd.f32 %v570, %v676
        %v678 = vpop.f32.mrb[0].mxu0
        %v679 = vadd.f32 %v572, %v678
        %680 = vmatprep.mubr.f32.mxu0 0.0
        %681 = vmatmul.mubr.f32.gmra.mrb[0].mxu0 %v596
        %v682 = vpop.f32.mrb[0].mxu0
        %v683 = vadd.f32 %v576, %v682
        %v684 = vpop.f32.mrb[0].mxu0
        %v685 = vadd.f32 %v578, %v684
        %686 = vmatprep.mubr.f32.mxu0 0.0
        %687 = vmatmul.mubr.f32.gmra.mrb[0].mxu0 %v599
        %v688 = vpop.f32.mrb[0].mxu0
        %v689 = vadd.f32 %v582, %v688
        %v690 = vpop.f32.mrb[0].mxu0
        %v691 = vadd.f32 %v584, %v690
        %692 = vmatprep.mubr.f32.mxu0 0.0
        %693 = vmatmul.mubr.f32.gmra.mrb[0].mxu0 %v602
        %v694 = vpop.f32.mrb[0].mxu0
        %v695 = vadd.f32 %v588, %v694
        %v696 = vpop.f32.mrb[0].mxu0
        %v697 = vadd.f32 %v590, %v696
        %698 = vdwg.mxu0
        %s699 = scalar_lea.vmem %s1, 160
        %v700 = vld [vmem:[%s699] sm:$0xff]
        %v701 = vld [vmem:[%s699 + $0x8] sm:$0xff]
        %v702 = vld [vmem:[%s699 + $0x10] sm:$0xff]
        %v703 = vld [vmem:[%s699 + $0x18] sm:$0xff]
        %v704 = vld [vmem:[%s699 + $0x20] sm:$0xff]
        %v705 = vld [vmem:[%s699 + $0x28] sm:$0xff]
        %v706 = vld [vmem:[%s699 + $0x30] sm:$0xff]
        %v707 = vld [vmem:[%s699 + $0x38] sm:$0xff]
        %v708 = vld [vmem:[%s699 + $0x40] sm:$0x7f]
        %v709 = vld [vmem:[%s699 + $0x48] sm:$0x7f]
        %v711 = vsel %vm483, %v444, 0
        %v714 = vsel %vm483, %v449, 0
        %v717 = vsel %vm483, %v454, 0
        %v720 = vsel %vm483, %v459, 0
        %v723 = vsel %vm496, %v708, 0
        %v726 = vsel %vm496, %v709, 0
        %728 = vmatprep.subr.mxu0 %v701
        %729 = vmatpush1.msra.mxu0 %v700
        %730 = vmatprep.subr.mxu0 %v703
        %731 = vmatpush1.msra.mxu0 %v702
        %732 = vmatprep.subr.mxu0 %v705
        %733 = vmatpush1.msra.mxu0 %v704
        %734 = vmatprep.subr.mxu0 %v707
        %735 = vmatpush1.msra.mxu0 %v706
        %736 = vmatprep.subr.mxu0 %v726
        %737 = vmatpush1.msra.mxu0 %v723
        %738 = vmatprep.subr.mxu0 0.0
        %739 = vmatpush1.msra.mxu0 0.0
        %740 = vmatprep.subr.mxu0 0.0
        %741 = vmatpush1.msra.mxu0 0.0
        %742 = vmatprep.subr.mxu0 0.0
        %743 = vmatpush1.msra.mxu0 0.0
        %744 = vmatprep.subr.mxu0 0.0
        %745 = vmatpush1.msra.mxu0 0.0
        %746 = vmatprep.subr.mxu0 0.0
        %747 = vmatpush1.msra.mxu0 0.0
        %748 = vmatprep.subr.mxu0 0.0
        %749 = vmatpush1.msra.mxu0 0.0
        %750 = vmatprep.subr.mxu0 0.0
        %751 = vmatpush1.msra.mxu0 0.0
        %752 = vmatprep.subr.mxu0 0.0
        %753 = vmatpush1.msra.mxu0 0.0
        %754 = vmatprep.subr.mxu0 0.0
        %755 = vmatpush1.msra.mxu0 0.0
        %756 = vmatprep.subr.mxu0 0.0
        %757 = vmatpush1.msra.mxu0 0.0
        %758 = vmatprep.subr.mxu0 0.0
        %759 = vmatpush1.msra.mxu0 0.0
        %760 = vmatprep.subr.mxu0 0.0
        %761 = vmatpush1.msra.mxu0 0.0
        %762 = vmatprep.subr.mxu0 0.0
        %763 = vmatpush1.msra.mxu0 0.0
        %764 = vmatprep.subr.mxu0 0.0
        %765 = vmatpush1.msra.mxu0 0.0
        %766 = vmatprep.subr.mxu0 0.0
        %767 = vmatpush1.msra.mxu0 0.0
        %768 = vmatprep.subr.mxu0 0.0
        %769 = vmatpush1.msra.mxu0 0.0
        %770 = vmatprep.subr.mxu0 0.0
        %771 = vmatpush1.msra.mxu0 0.0
        %772 = vmatprep.subr.mxu0 0.0
        %773 = vmatpush1.msra.mxu0 0.0
        %774 = vmatprep.subr.mxu0 0.0
        %775 = vmatpush1.msra.mxu0 0.0
        %776 = vmatprep.subr.mxu0 0.0
        %777 = vmatpush1.msra.mxu0 0.0
        %778 = vmatprep.subr.mxu0 0.0
        %779 = vmatpush1.msra.mxu0 0.0
        %780 = vmatprep.subr.mxu0 0.0
        %781 = vmatpush1.msra.mxu0 0.0
        %782 = vmatprep.subr.mxu0 0.0
        %783 = vmatpush1.msra.mxu0 0.0
        %784 = vmatprep.subr.mxu0 0.0
        %785 = vmatpush1.msra.mxu0 0.0
        %786 = vmatprep.subr.mxu0 0.0
        %787 = vmatpush1.msra.mxu0 0.0
        %788 = vmatprep.subr.mxu0 0.0
        %789 = vmatpush1.msra.mxu0 0.0
        %790 = vmatprep.subr.mxu0 0.0
        %791 = vmatpush1.msra.mxu0 0.0
        %792 = vmatprep.mubr.f32.mxu0 0.0
        %793 = vmatmul.mubr.f32.gmra.mrb[0].mxu0 %v711
        %v794 = vpop.f32.mrb[0].mxu0
        %v795 = vadd.f32 0.0, %v794
        %v796 = vpop.f32.mrb[0].mxu0
        %v797 = vadd.f32 0.0, %v796
        %798 = vmatprep.mubr.f32.mxu0 0.0
        %799 = vmatmul.mubr.f32.gmra.mrb[0].mxu0 %v714
        %v800 = vpop.f32.mrb[0].mxu0
        %v801 = vadd.f32 0.0, %v800
        %v802 = vpop.f32.mrb[0].mxu0
        %v803 = vadd.f32 0.0, %v802
        %804 = vmatprep.mubr.f32.mxu0 0.0
        %805 = vmatmul.mubr.f32.gmra.mrb[0].mxu0 %v717
        %v806 = vpop.f32.mrb[0].mxu0
        %v807 = vadd.f32 0.0, %v806
        %v808 = vpop.f32.mrb[0].mxu0
        %v809 = vadd.f32 0.0, %v808
        %810 = vmatprep.mubr.f32.mxu0 0.0
        %811 = vmatmul.mubr.f32.gmra.mrb[0].mxu0 %v720
        %v812 = vpop.f32.mrb[0].mxu0
        %v813 = vadd.f32 0.0, %v812
        %v814 = vpop.f32.mrb[0].mxu0
        %v815 = vadd.f32 0.0, %v814
        %816 = vdwg.mxu0
        %v817 = vadd.f32 %v677, %v795
        %v818 = vadd.f32 %v679, %v797
        %v819 = vadd.f32 %v683, %v801
        %v820 = vadd.f32 %v685, %v803
        %v821 = vadd.f32 %v689, %v807
        %v822 = vadd.f32 %v691, %v809
        %v823 = vadd.f32 %v695, %v813
        %v824 = vadd.f32 %v697, %v815
        %v826 = vlaneseq
        %v827 = vshrl.u32 %v826, 7
        %v828 = vsub.s32 0, %v827
        %v829 = vrot.slane %v227, %v828
        %v830 = vlaneseq
        %v831 = vshrl.u32 %v830, 7
        %v832 = vsub.s32 1, %v831
        %v833 = vrot.slane %v227, %v832
        %v836 = vadd.f32 %v817, %v829
        %v837 = vadd.f32 %v818, %v833
        %v838 = vadd.f32 %v819, %v829
        %v839 = vadd.f32 %v820, %v833
        %v840 = vadd.f32 %v821, %v829
        %v841 = vadd.f32 %v822, %v833
        %v842 = vadd.f32 %v823, %v829
        %v843 = vadd.f32 %v824, %v833
        %v844 = vmax.f32 %v836, 0.0
        %v845 = vmax.f32 %v837, 0.0
        %v846 = vmax.f32 %v838, 0.0
        %v847 = vmax.f32 %v839, 0.0
        %v848 = vmax.f32 %v840, 0.0
        %v849 = vmax.f32 %v841, 0.0
        %v850 = vmax.f32 %v842, 0.0
        %v851 = vmax.f32 %v843, 0.0
        %v852 = vmul.u32 %v229, 2
        %v853 = vmul.u32 %v230, 2
        %vm854 = vcmp.eq.s32.totalorder %v234, %v852
        %vm855 = vcmp.eq.s32.totalorder %v234, %v853
        %v856 = vsel %vm854, 1, 0
        %v857 = vsel %vm855, 1, 0
        %v858 = vcvt.s32.f32 %v856
        %v859 = vcvt.s32.f32 %v857
        %v860 = vadd.s32 %v852, 1
        %v861 = vadd.s32 %v853, 1
        %vm862 = vcmp.eq.s32.totalorder %v234, %v860
        %vm863 = vcmp.eq.s32.totalorder %v234, %v861
        %v864 = vsel %vm862, 1, 0
        %v865 = vsel %vm863, 1, 0
        %v866 = vcvt.s32.f32 %v864
        %v867 = vcvt.s32.f32 %v865
        %v869 = vsel %vm267, %v858, 0
        %v872 = vsel %vm267, %v859, 0
        %874 = vmatprep.subr.mxu0 %v845
        %875 = vmatpush1.msra.mxu0 %v844
        %876 = vmatprep.subr.mxu0 %v847
        %877 = vmatpush1.msra.mxu0 %v846
        %878 = vmatprep.subr.mxu0 %v849
        %879 = vmatpush1.msra.mxu0 %v848
        %880 = vmatprep.subr.mxu0 %v851
        %881 = vmatpush1.msra.mxu0 %v850
        %882 = vmatprep.subr.mxu0 0.0
        %883 = vmatpush1.msra.mxu0 0.0
        %884 = vmatprep.subr.mxu0 0.0
        %885 = vmatpush1.msra.mxu0 0.0
        %886 = vmatprep.subr.mxu0 0.0
        %887 = vmatpush1.msra.mxu0 0.0
        %888 = vmatprep.subr.mxu0 0.0
        %889 = vmatpush1.msra.mxu0 0.0
        %890 = vmatprep.subr.mxu0 0.0
        %891 = vmatpush1.msra.mxu0 0.0
        %892 = vmatprep.subr.mxu0 0.0
        %893 = vmatpush1.msra.mxu0 0.0
        %894 = vmatprep.subr.mxu0 0.0
        %895 = vmatpush1.msra.mxu0 0.0
        %896 = vmatprep.subr.mxu0 0.0
        %897 = vmatpush1.msra.mxu0 0.0
        %898 = vmatprep.subr.mxu0 0.0
        %899 = vmatpush1.msra.mxu0 0.0
        %900 = vmatprep.subr.mxu0 0.0
        %901 = vmatpush1.msra.mxu0 0.0
        %902 = vmatprep.subr.mxu0 0.0
        %903 = vmatpush1.msra.mxu0 0.0
        %904 = vmatprep.subr.mxu0 0.0
        %905 = vmatpush1.msra.mxu0 0.0
        %906 = vmatprep.subr.mxu0 0.0
        %907 = vmatpush1.msra.mxu0 0.0
        %908 = vmatprep.subr.mxu0 0.0
        %909 = vmatpush1.msra.mxu0 0.0
        %910 = vmatprep.subr.mxu0 0.0
        %911 = vmatpush1.msra.mxu0 0.0
        %912 = vmatprep.subr.mxu0 0.0
        %913 = vmatpush1.msra.mxu0 0.0
        %914 = vmatprep.subr.mxu0 0.0
        %915 = vmatpush1.msra.mxu0 0.0
        %916 = vmatprep.subr.mxu0 0.0
        %917 = vmatpush1.msra.mxu0 0.0
        %918 = vmatprep.subr.mxu0 0.0
        %919 = vmatpush1.msra.mxu0 0.0
        %920 = vmatprep.subr.mxu0 0.0
        %921 = vmatpush1.msra.mxu0 0.0
        %922 = vmatprep.subr.mxu0 0.0
        %923 = vmatpush1.msra.mxu0 0.0
        %924 = vmatprep.subr.mxu0 0.0
        %925 = vmatpush1.msra.mxu0 0.0
        %926 = vmatprep.subr.mxu0 0.0
        %927 = vmatpush1.msra.mxu0 0.0
        %928 = vmatprep.subr.mxu0 0.0
        %929 = vmatpush1.msra.mxu0 0.0
        %930 = vmatprep.subr.mxu0 0.0
        %931 = vmatpush1.msra.mxu0 0.0
        %932 = vmatprep.subr.mxu0 0.0
        %933 = vmatpush1.msra.mxu0 0.0
        %934 = vmatprep.subr.mxu0 0.0
        %935 = vmatpush1.msra.mxu0 0.0
        %936 = vmatprep.subr.mxu0 0.0
        %937 = vmatpush1.msra.mxu0 0.0
        %938 = vmatprep.mubr.f32.mxu0 0.0
        %939 = vmatmul.mubr.f32.gmra.mrb[0].mxu0 %v869
        %v940 = vpop.f32.mrb[0].mxu0
        %v941 = vadd.f32 0.0, %v940
        %v942 = vpop.f32.mrb[0].mxu0
        %v943 = vadd.f32 0.0, %v942
        %944 = vmatprep.mubr.f32.mxu0 0.0
        %945 = vmatmul.mubr.f32.gmra.mrb[0].mxu0 %v872
        %v946 = vpop.f32.mrb[0].mxu0
        %v947 = vadd.f32 0.0, %v946
        %v948 = vpop.f32.mrb[0].mxu0
        %v949 = vadd.f32 0.0, %v948
        %950 = vdwg.mxu0
        %v952 = vsel %vm267, %v866, 0
        %v955 = vsel %vm267, %v867, 0
        %957 = vmatprep.subr.mxu0 %v845
        %958 = vmatpush1.msra.mxu0 %v844
        %959 = vmatprep.subr.mxu0 %v847
        %960 = vmatpush1.msra.mxu0 %v846
        %961 = vmatprep.subr.mxu0 %v849
        %962 = vmatpush1.msra.mxu0 %v848
        %963 = vmatprep.subr.mxu0 %v851
        %964 = vmatpush1.msra.mxu0 %v850
        %965 = vmatprep.subr.mxu0 0.0
        %966 = vmatpush1.msra.mxu0 0.0
        %967 = vmatprep.subr.mxu0 0.0
        %968 = vmatpush1.msra.mxu0 0.0
        %969 = vmatprep.subr.mxu0 0.0
        %970 = vmatpush1.msra.mxu0 0.0
        %971 = vmatprep.subr.mxu0 0.0
        %972 = vmatpush1.msra.mxu0 0.0
        %973 = vmatprep.subr.mxu0 0.0
        %974 = vmatpush1.msra.mxu0 0.0
        %975 = vmatprep.subr.mxu0 0.0
        %976 = vmatpush1.msra.mxu0 0.0
        %977 = vmatprep.subr.mxu0 0.0
        %978 = vmatpush1.msra.mxu0 0.0
        %979 = vmatprep.subr.mxu0 0.0
        %980 = vmatpush1.msra.mxu0 0.0
        %981 = vmatprep.subr.mxu0 0.0
        %982 = vmatpush1.msra.mxu0 0.0
        %983 = vmatprep.subr.mxu0 0.0
        %984 = vmatpush1.msra.mxu0 0.0
        %985 = vmatprep.subr.mxu0 0.0
        %986 = vmatpush1.msra.mxu0 0.0
        %987 = vmatprep.subr.mxu0 0.0
        %988 = vmatpush1.msra.mxu0 0.0
        %989 = vmatprep.subr.mxu0 0.0
        %990 = vmatpush1.msra.mxu0 0.0
        %991 = vmatprep.subr.mxu0 0.0
        %992 = vmatpush1.msra.mxu0 0.0
        %993 = vmatprep.subr.mxu0 0.0
        %994 = vmatpush1.msra.mxu0 0.0
        %995 = vmatprep.subr.mxu0 0.0
        %996 = vmatpush1.msra.mxu0 0.0
        %997 = vmatprep.subr.mxu0 0.0
        %998 = vmatpush1.msra.mxu0 0.0
        %999 = vmatprep.subr.mxu0 0.0
        %1000 = vmatpush1.msra.mxu0 0.0
        %1001 = vmatprep.subr.mxu0 0.0
        %1002 = vmatpush1.msra.mxu0 0.0
        %1003 = vmatprep.subr.mxu0 0.0
        %1004 = vmatpush1.msra.mxu0 0.0
        %1005 = vmatprep.subr.mxu0 0.0
        %1006 = vmatpush1.msra.mxu0 0.0
        %1007 = vmatprep.subr.mxu0 0.0
        %1008 = vmatpush1.msra.mxu0 0.0
        %1009 = vmatprep.subr.mxu0 0.0
        %1010 = vmatpush1.msra.mxu0 0.0
        %1011 = vmatprep.subr.mxu0 0.0
        %1012 = vmatpush1.msra.mxu0 0.0
        %1013 = vmatprep.subr.mxu0 0.0
        %1014 = vmatpush1.msra.mxu0 0.0
        %1015 = vmatprep.subr.mxu0 0.0
        %1016 = vmatpush1.msra.mxu0 0.0
        %1017 = vmatprep.subr.mxu0 0.0
        %1018 = vmatpush1.msra.mxu0 0.0
        %1019 = vmatprep.subr.mxu0 0.0
        %1020 = vmatpush1.msra.mxu0 0.0
        %1021 = vmatprep.mubr.f32.mxu0 0.0
        %1022 = vmatmul.mubr.f32.gmra.mrb[0].mxu0 %v952
        %v1023 = vpop.f32.mrb[0].mxu0
        %v1024 = vadd.f32 0.0, %v1023
        %v1025 = vpop.f32.mrb[0].mxu0
        %v1026 = vadd.f32 0.0, %v1025
        %1027 = vmatprep.mubr.f32.mxu0 0.0
        %1028 = vmatmul.mubr.f32.gmra.mrb[0].mxu0 %v955
        %v1029 = vpop.f32.mrb[0].mxu0
        %v1030 = vadd.f32 0.0, %v1029
        %v1031 = vpop.f32.mrb[0].mxu0
        %v1032 = vadd.f32 0.0, %v1031
        %1033 = vdwg.mxu0
        %v1034 = vmax.f32 %v941, %v1024
        %v1035 = vmax.f32 %v943, %v1026
        %v1036 = vmax.f32 %v947, %v1030
        %v1037 = vmax.f32 %v949, %v1032
        %v1038 = vld [vmem:[%s4] sm:$0x1]
        %vm1039 = vcmask 130048
        %v1040 = vsel %vm1039, %v247, 0
        %v1042 = vsel %vm1039, %v248, 0
        %1044 = vmatprep.subr.mxu0 %v1035
        %1045 = vmatpush1.msra.mxu0 %v1034
        %1046 = vmatprep.subr.mxu0 %v1037
        %1047 = vmatpush1.msra.mxu0 %v1036
        %1048 = vmatprep.subr.mxu0 0.0
        %1049 = vmatpush1.msra.mxu0 0.0
        %1050 = vmatprep.subr.mxu0 0.0
        %1051 = vmatpush1.msra.mxu0 0.0
        %1052 = vmatprep.subr.mxu0 0.0
        %1053 = vmatpush1.msra.mxu0 0.0
        %1054 = vmatprep.subr.mxu0 0.0
        %1055 = vmatpush1.msra.mxu0 0.0
        %1056 = vmatprep.subr.mxu0 0.0
        %1057 = vmatpush1.msra.mxu0 0.0
        %1058 = vmatprep.subr.mxu0 0.0
        %1059 = vmatpush1.msra.mxu0 0.0
        %1060 = vmatprep.subr.mxu0 0.0
        %1061 = vmatpush1.msra.mxu0 0.0
        %1062 = vmatprep.subr.mxu0 0.0
        %1063 = vmatpush1.msra.mxu0 0.0
        %1064 = vmatprep.subr.mxu0 0.0
        %1065 = vmatpush1.msra.mxu0 0.0
        %1066 = vmatprep.subr.mxu0 0.0
        %1067 = vmatpush1.msra.mxu0 0.0
        %1068 = vmatprep.subr.mxu0 0.0
        %1069 = vmatpush1.msra.mxu0 0.0
        %1070 = vmatprep.subr.mxu0 0.0
        %1071 = vmatpush1.msra.mxu0 0.0
        %1072 = vmatprep.subr.mxu0 0.0
        %1073 = vmatpush1.msra.mxu0 0.0
        %1074 = vmatprep.subr.mxu0 0.0
        %1075 = vmatpush1.msra.mxu0 0.0
        %1076 = vmatprep.subr.mxu0 0.0
        %1077 = vmatpush1.msra.mxu0 0.0
        %1078 = vmatprep.subr.mxu0 0.0
        %1079 = vmatpush1.msra.mxu0 0.0
        %1080 = vmatprep.subr.mxu0 0.0
        %1081 = vmatpush1.msra.mxu0 0.0
        %1082 = vmatprep.subr.mxu0 0.0
        %1083 = vmatpush1.msra.mxu0 0.0
        %1084 = vmatprep.subr.mxu0 0.0
        %1085 = vmatpush1.msra.mxu0 0.0
        %1086 = vmatprep.subr.mxu0 0.0
        %1087 = vmatpush1.msra.mxu0 0.0
        %1088 = vmatprep.subr.mxu0 0.0
        %1089 = vmatpush1.msra.mxu0 0.0
        %1090 = vmatprep.subr.mxu0 0.0
        %1091 = vmatpush1.msra.mxu0 0.0
        %1092 = vmatprep.subr.mxu0 0.0
        %1093 = vmatpush1.msra.mxu0 0.0
        %1094 = vmatprep.subr.mxu0 0.0
        %1095 = vmatpush1.msra.mxu0 0.0
        %1096 = vmatprep.subr.mxu0 0.0
        %1097 = vmatpush1.msra.mxu0 0.0
        %1098 = vmatprep.subr.mxu0 0.0
        %1099 = vmatpush1.msra.mxu0 0.0
        %1100 = vmatprep.subr.mxu0 0.0
        %1101 = vmatpush1.msra.mxu0 0.0
        %1102 = vmatprep.subr.mxu0 0.0
        %1103 = vmatpush1.msra.mxu0 0.0
        %1104 = vmatprep.subr.mxu0 0.0
        %1105 = vmatpush1.msra.mxu0 0.0
        %1106 = vmatprep.subr.mxu0 0.0
        %1107 = vmatpush1.msra.mxu0 0.0
        %1108 = vmatprep.mubr.f32.mxu0 0.0
        %1109 = vmatmul.mubr.f32.gmra.mrb[0].mxu0 %v1040
        %v1110 = vpop.f32.mrb[0].mxu0
        %v1111 = vadd.f32 0.0, %v1110
        %v1112 = vpop.f32.mrb[0].mxu0
        %v1113 = vadd.f32 0.0, %v1112
        %1114 = vmatprep.mubr.f32.mxu0 0.0
        %1115 = vmatmul.mubr.f32.gmra.mrb[0].mxu0 %v1042
        %v1116 = vpop.f32.mrb[0].mxu0
        %v1117 = vadd.f32 0.0, %v1116
        %v1118 = vpop.f32.mrb[0].mxu0
        %v1119 = vadd.f32 0.0, %v1118
        %1120 = vdwg.mxu0
        %v1121 = vsel %vm1039, %v263, 0
        %v1123 = vsel %vm1039, %v264, 0
        %1125 = vmatprep.subr.mxu0 %v1035
        %1126 = vmatpush1.msra.mxu0 %v1034
        %1127 = vmatprep.subr.mxu0 %v1037
        %1128 = vmatpush1.msra.mxu0 %v1036
        %1129 = vmatprep.subr.mxu0 0.0
        %1130 = vmatpush1.msra.mxu0 0.0
        %1131 = vmatprep.subr.mxu0 0.0
        %1132 = vmatpush1.msra.mxu0 0.0
        %1133 = vmatprep.subr.mxu0 0.0
        %1134 = vmatpush1.msra.mxu0 0.0
        %1135 = vmatprep.subr.mxu0 0.0
        %1136 = vmatpush1.msra.mxu0 0.0
        %1137 = vmatprep.subr.mxu0 0.0
        %1138 = vmatpush1.msra.mxu0 0.0
        %1139 = vmatprep.subr.mxu0 0.0
        %1140 = vmatpush1.msra.mxu0 0.0
        %1141 = vmatprep.subr.mxu0 0.0
        %1142 = vmatpush1.msra.mxu0 0.0
        %1143 = vmatprep.subr.mxu0 0.0
        %1144 = vmatpush1.msra.mxu0 0.0
        %1145 = vmatprep.subr.mxu0 0.0
        %1146 = vmatpush1.msra.mxu0 0.0
        %1147 = vmatprep.subr.mxu0 0.0
        %1148 = vmatpush1.msra.mxu0 0.0
        %1149 = vmatprep.subr.mxu0 0.0
        %1150 = vmatpush1.msra.mxu0 0.0
        %1151 = vmatprep.subr.mxu0 0.0
        %1152 = vmatpush1.msra.mxu0 0.0
        %1153 = vmatprep.subr.mxu0 0.0
        %1154 = vmatpush1.msra.mxu0 0.0
        %1155 = vmatprep.subr.mxu0 0.0
        %1156 = vmatpush1.msra.mxu0 0.0
        %1157 = vmatprep.subr.mxu0 0.0
        %1158 = vmatpush1.msra.mxu0 0.0
        %1159 = vmatprep.subr.mxu0 0.0
        %1160 = vmatpush1.msra.mxu0 0.0
        %1161 = vmatprep.subr.mxu0 0.0
        %1162 = vmatpush1.msra.mxu0 0.0
        %1163 = vmatprep.subr.mxu0 0.0
        %1164 = vmatpush1.msra.mxu0 0.0
        %1165 = vmatprep.subr.mxu0 0.0
        %1166 = vmatpush1.msra.mxu0 0.0
        %1167 = vmatprep.subr.mxu0 0.0
        %1168 = vmatpush1.msra.mxu0 0.0
        %1169 = vmatprep.subr.mxu0 0.0
        %1170 = vmatpush1.msra.mxu0 0.0
        %1171 = vmatprep.subr.mxu0 0.0
        %1172 = vmatpush1.msra.mxu0 0.0
        %1173 = vmatprep.subr.mxu0 0.0
        %1174 = vmatpush1.msra.mxu0 0.0
        %1175 = vmatprep.subr.mxu0 0.0
        %1176 = vmatpush1.msra.mxu0 0.0
        %1177 = vmatprep.subr.mxu0 0.0
        %1178 = vmatpush1.msra.mxu0 0.0
        %1179 = vmatprep.subr.mxu0 0.0
        %1180 = vmatpush1.msra.mxu0 0.0
        %1181 = vmatprep.subr.mxu0 0.0
        %1182 = vmatpush1.msra.mxu0 0.0
        %1183 = vmatprep.subr.mxu0 0.0
        %1184 = vmatpush1.msra.mxu0 0.0
        %1185 = vmatprep.subr.mxu0 0.0
        %1186 = vmatpush1.msra.mxu0 0.0
        %1187 = vmatprep.subr.mxu0 0.0
        %1188 = vmatpush1.msra.mxu0 0.0
        %1189 = vmatprep.mubr.f32.mxu0 0.0
        %1190 = vmatmul.mubr.f32.gmra.mrb[0].mxu0 %v1121
        %v1191 = vpop.f32.mrb[0].mxu0
        %v1192 = vadd.f32 0.0, %v1191
        %v1193 = vpop.f32.mrb[0].mxu0
        %v1194 = vadd.f32 0.0, %v1193
        %1195 = vmatprep.mubr.f32.mxu0 0.0
        %1196 = vmatmul.mubr.f32.gmra.mrb[0].mxu0 %v1123
        %v1197 = vpop.f32.mrb[0].mxu0
        %v1198 = vadd.f32 0.0, %v1197
        %v1199 = vpop.f32.mrb[0].mxu0
        %v1200 = vadd.f32 0.0, %v1199
        %1201 = vdwg.mxu0
        %v1202 = vld [vmem:[%s3] sm:$0xff]
        %v1203 = vld [vmem:[%s3 + $0x8] sm:$0xff]
        %v1204 = vld [vmem:[%s3 + $0x10] sm:$0xff]
        %v1205 = vld [vmem:[%s3 + $0x18] sm:$0xff]
        %v1206 = vld [vmem:[%s3 + $0x20] sm:$0xff]
        %v1207 = vld [vmem:[%s3 + $0x28] sm:$0xff]
        %v1208 = vld [vmem:[%s3 + $0x30] sm:$0xff]
        %v1209 = vld [vmem:[%s3 + $0x38] sm:$0xff]
        %v1210 = vld [vmem:[%s3 + $0x40] sm:$0xff]
        %v1211 = vld [vmem:[%s3 + $0x48] sm:$0xff]
        %v1212 = vld [vmem:[%s3 + $0x50] sm:$0xff]
        %v1213 = vld [vmem:[%s3 + $0x58] sm:$0xff]
        %v1214 = vld [vmem:[%s3 + $0x60] sm:$0xff]
        %v1215 = vld [vmem:[%s3 + $0x68] sm:$0xff]
        %v1216 = vld [vmem:[%s3 + $0x70] sm:$0xff]
        %v1217 = vld [vmem:[%s3 + $0x78] sm:$0xff]
        %v1218 = vld [vmem:[%s3 + $0x80] sm:$0xff]
        %v1219 = vld [vmem:[%s3 + $0x88] sm:$0xff]
        %v1220 = vld [vmem:[%s3 + $0x90] sm:$0xff]
        %v1221 = vld [vmem:[%s3 + $0x98] sm:$0xff]
        %v1222 = vld [vmem:[%s3 + $0xa0] sm:$0xff]
        %v1223 = vld [vmem:[%s3 + $0xa8] sm:$0xff]
        %v1224 = vld [vmem:[%s3 + $0xb0] sm:$0xff]
        %v1225 = vld [vmem:[%s3 + $0xb8] sm:$0xff]
        %v1226 = vld [vmem:[%s3 + $0xc0] sm:$0xff]
        %v1227 = vld [vmem:[%s3 + $0xc8] sm:$0xff]
        %v1228 = vld [vmem:[%s3 + $0xd0] sm:$0xff]
        %v1229 = vld [vmem:[%s3 + $0xd8] sm:$0xff]
        %v1230 = vld [vmem:[%s3 + $0xe0] sm:$0xff]
        %v1231 = vld [vmem:[%s3 + $0xe8] sm:$0xff]
        %v1232 = vld [vmem:[%s3 + $0xf0] sm:$0xff]
        %v1233 = vld [vmem:[%s3 + $0xf8] sm:$0xff]
        %s1234 = scalar_lea.vmem %s3, 256
        %v1235 = vld [vmem:[%s1234] sm:$0xff]
        %v1236 = vld [vmem:[%s1234 + $0x8] sm:$0xff]
        %v1237 = vld [vmem:[%s1234 + $0x10] sm:$0xff]
        %v1238 = vld [vmem:[%s1234 + $0x18] sm:$0xff]
        %v1239 = vld [vmem:[%s1234 + $0x20] sm:$0xff]
        %v1240 = vld [vmem:[%s1234 + $0x28] sm:$0xff]
        %v1241 = vld [vmem:[%s1234 + $0x30] sm:$0xff]
        %v1242 = vld [vmem:[%s1234 + $0x38] sm:$0xff]
        %v1243 = vld [vmem:[%s1234 + $0x40] sm:$0xff]
        %v1244 = vld [vmem:[%s1234 + $0x48] sm:$0xff]
        %v1245 = vld [vmem:[%s1234 + $0x50] sm:$0xff]
        %v1246 = vld [vmem:[%s1234 + $0x58] sm:$0xff]
        %v1247 = vld [vmem:[%s1234 + $0x60] sm:$0xff]
        %v1248 = vld [vmem:[%s1234 + $0x68] sm:$0xff]
        %v1249 = vld [vmem:[%s1234 + $0x70] sm:$0xff]
        %v1250 = vld [vmem:[%s1234 + $0x78] sm:$0xff]
        %v1251 = vld [vmem:[%s1234 + $0x80] sm:$0xff]
        %v1252 = vld [vmem:[%s1234 + $0x88] sm:$0xff]
        %v1253 = vld [vmem:[%s1234 + $0x90] sm:$0xff]
        %v1254 = vld [vmem:[%s1234 + $0x98] sm:$0xff]
        %v1255 = vld [vmem:[%s1234 + $0xa0] sm:$0xff]
        %v1256 = vld [vmem:[%s1234 + $0xa8] sm:$0xff]
        %v1257 = vld [vmem:[%s1234 + $0xb0] sm:$0xff]
        %v1258 = vld [vmem:[%s1234 + $0xb8] sm:$0xff]
        %v1259 = vld [vmem:[%s1234 + $0xc0] sm:$0xff]
        %v1260 = vld [vmem:[%s1234 + $0xc8] sm:$0xff]
        %v1261 = vld [vmem:[%s1234 + $0xd0] sm:$0xff]
        %v1262 = vld [vmem:[%s1234 + $0xd8] sm:$0xff]
        %v1263 = vld [vmem:[%s1234 + $0xe0] sm:$0xff]
        %v1264 = vld [vmem:[%s1234 + $0xe8] sm:$0xff]
        %v1265 = vld [vmem:[%s1234 + $0xf0] sm:$0xff]
        %v1266 = vld [vmem:[%s1234 + $0xf8] sm:$0xff]
        %1267 = vmatprep.subr.mxu0 0.0
        %1268 = vmatpush1.msra.mxu0 %v1235
        %1269 = vmatprep.subr.mxu0 0.0
        %1270 = vmatpush1.msra.mxu0 %v1236
        %1271 = vmatprep.subr.mxu0 0.0
        %1272 = vmatpush1.msra.mxu0 %v1237
        %1273 = vmatprep.subr.mxu0 0.0
        %1274 = vmatpush1.msra.mxu0 %v1238
        %1275 = vmatprep.subr.mxu0 0.0
        %1276 = vmatpush1.msra.mxu0 %v1239
        %1277 = vmatprep.subr.mxu0 0.0
        %1278 = vmatpush1.msra.mxu0 %v1240
        %1279 = vmatprep.subr.mxu0 0.0
        %1280 = vmatpush1.msra.mxu0 %v1241
        %1281 = vmatprep.subr.mxu0 0.0
        %1282 = vmatpush1.msra.mxu0 %v1242
        %1283 = vmatprep.subr.mxu0 0.0
        %1284 = vmatpush1.msra.mxu0 %v1243
        %1285 = vmatprep.subr.mxu0 0.0
        %1286 = vmatpush1.msra.mxu0 %v1244
        %1287 = vmatprep.subr.mxu0 0.0
        %1288 = vmatpush1.msra.mxu0 %v1245
        %1289 = vmatprep.subr.mxu0 0.0
        %1290 = vmatpush1.msra.mxu0 %v1246
        %1291 = vmatprep.subr.mxu0 0.0
        %1292 = vmatpush1.msra.mxu0 %v1247
        %1293 = vmatprep.subr.mxu0 0.0
        %1294 = vmatpush1.msra.mxu0 %v1248
        %1295 = vmatprep.subr.mxu0 0.0
        %1296 = vmatpush1.msra.mxu0 %v1249
        %1297 = vmatprep.subr.mxu0 0.0
        %1298 = vmatpush1.msra.mxu0 %v1250
        %1299 = vmatprep.subr.mxu0 0.0
        %1300 = vmatpush1.msra.mxu0 %v1251
        %1301 = vmatprep.subr.mxu0 0.0
        %1302 = vmatpush1.msra.mxu0 %v1252
        %1303 = vmatprep.subr.mxu0 0.0
        %1304 = vmatpush1.msra.mxu0 %v1253
        %1305 = vmatprep.subr.mxu0 0.0
        %1306 = vmatpush1.msra.mxu0 %v1254
        %1307 = vmatprep.subr.mxu0 0.0
        %1308 = vmatpush1.msra.mxu0 %v1255
        %1309 = vmatprep.subr.mxu0 0.0
        %1310 = vmatpush1.msra.mxu0 %v1256
        %1311 = vmatprep.subr.mxu0 0.0
        %1312 = vmatpush1.msra.mxu0 %v1257
        %1313 = vmatprep.subr.mxu0 0.0
        %1314 = vmatpush1.msra.mxu0 %v1258
        %1315 = vmatprep.subr.mxu0 0.0
        %1316 = vmatpush1.msra.mxu0 %v1259
        %1317 = vmatprep.subr.mxu0 0.0
        %1318 = vmatpush1.msra.mxu0 %v1260
        %1319 = vmatprep.subr.mxu0 0.0
        %1320 = vmatpush1.msra.mxu0 %v1261
        %1321 = vmatprep.subr.mxu0 0.0
        %1322 = vmatpush1.msra.mxu0 %v1262
        %1323 = vmatprep.subr.mxu0 0.0
        %1324 = vmatpush1.msra.mxu0 %v1263
        %1325 = vmatprep.subr.mxu0 0.0
        %1326 = vmatpush1.msra.mxu0 %v1264
        %1327 = vmatprep.subr.mxu0 0.0
        %1328 = vmatpush1.msra.mxu0 %v1265
        %1329 = vmatprep.subr.mxu0 0.0
        %1330 = vmatpush1.msra.mxu0 %v1266
        %1331 = vmatprep.mubr.f32.mxu0 %v1035
        %1332 = vmatmul.mubr.f32.gmra.mrb[0].mxu0 %v1034
        %v1333 = vpop.f32.mrb[0].mxu0
        %v1334 = vadd.f32 0.0, %v1333
        %v1335 = vpop.f32.mrb[0].mxu0
        %1336 = vmatprep.mubr.f32.mxu0 %v1037
        %1337 = vmatmul.mubr.f32.gmra.mrb[0].mxu0 %v1036
        %v1338 = vpop.f32.mrb[0].mxu0
        %v1339 = vadd.f32 0.0, %v1338
        %v1340 = vpop.f32.mrb[0].mxu0
        %1341 = vdwg.mxu0
        %1342 = vmatprep.subr.mxu0 0.0
        %1343 = vmatpush1.msra.mxu0 %v1202
        %1344 = vmatprep.subr.mxu0 0.0
        %1345 = vmatpush1.msra.mxu0 %v1203
        %1346 = vmatprep.subr.mxu0 0.0
        %1347 = vmatpush1.msra.mxu0 %v1204
        %1348 = vmatprep.subr.mxu0 0.0
        %1349 = vmatpush1.msra.mxu0 %v1205
        %1350 = vmatprep.subr.mxu0 0.0
        %1351 = vmatpush1.msra.mxu0 %v1206
        %1352 = vmatprep.subr.mxu0 0.0
        %1353 = vmatpush1.msra.mxu0 %v1207
        %1354 = vmatprep.subr.mxu0 0.0
        %1355 = vmatpush1.msra.mxu0 %v1208
        %1356 = vmatprep.subr.mxu0 0.0
        %1357 = vmatpush1.msra.mxu0 %v1209
        %1358 = vmatprep.subr.mxu0 0.0
        %1359 = vmatpush1.msra.mxu0 %v1210
        %1360 = vmatprep.subr.mxu0 0.0
        %1361 = vmatpush1.msra.mxu0 %v1211
        %1362 = vmatprep.subr.mxu0 0.0
        %1363 = vmatpush1.msra.mxu0 %v1212
        %1364 = vmatprep.subr.mxu0 0.0
        %1365 = vmatpush1.msra.mxu0 %v1213
        %1366 = vmatprep.subr.mxu0 0.0
        %1367 = vmatpush1.msra.mxu0 %v1214
        %1368 = vmatprep.subr.mxu0 0.0
        %1369 = vmatpush1.msra.mxu0 %v1215
        %1370 = vmatprep.subr.mxu0 0.0
        %1371 = vmatpush1.msra.mxu0 %v1216
        %1372 = vmatprep.subr.mxu0 0.0
        %1373 = vmatpush1.msra.mxu0 %v1217
        %1374 = vmatprep.subr.mxu0 0.0
        %1375 = vmatpush1.msra.mxu0 %v1218
        %1376 = vmatprep.subr.mxu0 0.0
        %1377 = vmatpush1.msra.mxu0 %v1219
        %1378 = vmatprep.subr.mxu0 0.0
        %1379 = vmatpush1.msra.mxu0 %v1220
        %1380 = vmatprep.subr.mxu0 0.0
        %1381 = vmatpush1.msra.mxu0 %v1221
        %1382 = vmatprep.subr.mxu0 0.0
        %1383 = vmatpush1.msra.mxu0 %v1222
        %1384 = vmatprep.subr.mxu0 0.0
        %1385 = vmatpush1.msra.mxu0 %v1223
        %1386 = vmatprep.subr.mxu0 0.0
        %1387 = vmatpush1.msra.mxu0 %v1224
        %1388 = vmatprep.subr.mxu0 0.0
        %1389 = vmatpush1.msra.mxu0 %v1225
        %1390 = vmatprep.subr.mxu0 0.0
        %1391 = vmatpush1.msra.mxu0 %v1226
        %1392 = vmatprep.subr.mxu0 0.0
        %1393 = vmatpush1.msra.mxu0 %v1227
        %1394 = vmatprep.subr.mxu0 0.0
        %1395 = vmatpush1.msra.mxu0 %v1228
        %1396 = vmatprep.subr.mxu0 0.0
        %1397 = vmatpush1.msra.mxu0 %v1229
        %1398 = vmatprep.subr.mxu0 0.0
        %1399 = vmatpush1.msra.mxu0 %v1230
        %1400 = vmatprep.subr.mxu0 0.0
        %1401 = vmatpush1.msra.mxu0 %v1231
        %1402 = vmatprep.subr.mxu0 0.0
        %1403 = vmatpush1.msra.mxu0 %v1232
        %1404 = vmatprep.subr.mxu0 0.0
        %1405 = vmatpush1.msra.mxu0 %v1233
        %1406 = vmatprep.mubr.f32.mxu0 %v1113
        %1407 = vmatmul.mubr.f32.gmra.mrb[0].mxu0 %v1111
        %v1408 = vpop.f32.mrb[0].mxu0
        %v1409 = vadd.f32 %v1334, %v1408
        %v1410 = vpop.f32.mrb[0].mxu0
        %1411 = vmatprep.mubr.f32.mxu0 %v1119
        %1412 = vmatmul.mubr.f32.gmra.mrb[0].mxu0 %v1117
        %v1413 = vpop.f32.mrb[0].mxu0
        %v1414 = vadd.f32 %v1339, %v1413
        %v1415 = vpop.f32.mrb[0].mxu0
        %1416 = vdwg.mxu0
        %s1417 = scalar_lea.vmem %s3, 512
        %v1418 = vld [vmem:[%s1417] sm:$0xff]
        %v1419 = vld [vmem:[%s1417 + $0x8] sm:$0xff]
        %v1420 = vld [vmem:[%s1417 + $0x10] sm:$0xff]
        %v1421 = vld [vmem:[%s1417 + $0x18] sm:$0xff]
        %v1422 = vld [vmem:[%s1417 + $0x20] sm:$0xff]
        %v1423 = vld [vmem:[%s1417 + $0x28] sm:$0xff]
        %v1424 = vld [vmem:[%s1417 + $0x30] sm:$0xff]
        %v1425 = vld [vmem:[%s1417 + $0x38] sm:$0xff]
        %v1426 = vld [vmem:[%s1417 + $0x40] sm:$0xff]
        %v1427 = vld [vmem:[%s1417 + $0x48] sm:$0xff]
        %v1428 = vld [vmem:[%s1417 + $0x50] sm:$0xff]
        %v1429 = vld [vmem:[%s1417 + $0x58] sm:$0xff]
        %v1430 = vld [vmem:[%s1417 + $0x60] sm:$0xff]
        %v1431 = vld [vmem:[%s1417 + $0x68] sm:$0xff]
        %v1432 = vld [vmem:[%s1417 + $0x70] sm:$0xff]
        %v1433 = vld [vmem:[%s1417 + $0x78] sm:$0xff]
        %v1434 = vld [vmem:[%s1417 + $0x80] sm:$0xff]
        %v1435 = vld [vmem:[%s1417 + $0x88] sm:$0xff]
        %v1436 = vld [vmem:[%s1417 + $0x90] sm:$0xff]
        %v1437 = vld [vmem:[%s1417 + $0x98] sm:$0xff]
        %v1438 = vld [vmem:[%s1417 + $0xa0] sm:$0xff]
        %v1439 = vld [vmem:[%s1417 + $0xa8] sm:$0xff]
        %v1440 = vld [vmem:[%s1417 + $0xb0] sm:$0xff]
        %v1441 = vld [vmem:[%s1417 + $0xb8] sm:$0xff]
        %v1442 = vld [vmem:[%s1417 + $0xc0] sm:$0xff]
        %v1443 = vld [vmem:[%s1417 + $0xc8] sm:$0xff]
        %v1444 = vld [vmem:[%s1417 + $0xd0] sm:$0xff]
        %v1445 = vld [vmem:[%s1417 + $0xd8] sm:$0xff]
        %v1446 = vld [vmem:[%s1417 + $0xe0] sm:$0xff]
        %v1447 = vld [vmem:[%s1417 + $0xe8] sm:$0xff]
        %v1448 = vld [vmem:[%s1417 + $0xf0] sm:$0xff]
        %v1449 = vld [vmem:[%s1417 + $0xf8] sm:$0xff]
        %1450 = vmatprep.subr.mxu0 0.0
        %1451 = vmatpush1.msra.mxu0 %v1418
        %1452 = vmatprep.subr.mxu0 0.0
        %1453 = vmatpush1.msra.mxu0 %v1419
        %1454 = vmatprep.subr.mxu0 0.0
        %1455 = vmatpush1.msra.mxu0 %v1420
        %1456 = vmatprep.subr.mxu0 0.0
        %1457 = vmatpush1.msra.mxu0 %v1421
        %1458 = vmatprep.subr.mxu0 0.0
        %1459 = vmatpush1.msra.mxu0 %v1422
        %1460 = vmatprep.subr.mxu0 0.0
        %1461 = vmatpush1.msra.mxu0 %v1423
        %1462 = vmatprep.subr.mxu0 0.0
        %1463 = vmatpush1.msra.mxu0 %v1424
        %1464 = vmatprep.subr.mxu0 0.0
        %1465 = vmatpush1.msra.mxu0 %v1425
        %1466 = vmatprep.subr.mxu0 0.0
        %1467 = vmatpush1.msra.mxu0 %v1426
        %1468 = vmatprep.subr.mxu0 0.0
        %1469 = vmatpush1.msra.mxu0 %v1427
        %1470 = vmatprep.subr.mxu0 0.0
        %1471 = vmatpush1.msra.mxu0 %v1428
        %1472 = vmatprep.subr.mxu0 0.0
        %1473 = vmatpush1.msra.mxu0 %v1429
        %1474 = vmatprep.subr.mxu0 0.0
        %1475 = vmatpush1.msra.mxu0 %v1430
        %1476 = vmatprep.subr.mxu0 0.0
        %1477 = vmatpush1.msra.mxu0 %v1431
        %1478 = vmatprep.subr.mxu0 0.0
        %1479 = vmatpush1.msra.mxu0 %v1432
        %1480 = vmatprep.subr.mxu0 0.0
        %1481 = vmatpush1.msra.mxu0 %v1433
        %1482 = vmatprep.subr.mxu0 0.0
        %1483 = vmatpush1.msra.mxu0 %v1434
        %1484 = vmatprep.subr.mxu0 0.0
        %1485 = vmatpush1.msra.mxu0 %v1435
        %1486 = vmatprep.subr.mxu0 0.0
        %1487 = vmatpush1.msra.mxu0 %v1436
        %1488 = vmatprep.subr.mxu0 0.0
        %1489 = vmatpush1.msra.mxu0 %v1437
        %1490 = vmatprep.subr.mxu0 0.0
        %1491 = vmatpush1.msra.mxu0 %v1438
        %1492 = vmatprep.subr.mxu0 0.0
        %1493 = vmatpush1.msra.mxu0 %v1439
        %1494 = vmatprep.subr.mxu0 0.0
        %1495 = vmatpush1.msra.mxu0 %v1440
        %1496 = vmatprep.subr.mxu0 0.0
        %1497 = vmatpush1.msra.mxu0 %v1441
        %1498 = vmatprep.subr.mxu0 0.0
        %1499 = vmatpush1.msra.mxu0 %v1442
        %1500 = vmatprep.subr.mxu0 0.0
        %1501 = vmatpush1.msra.mxu0 %v1443
        %1502 = vmatprep.subr.mxu0 0.0
        %1503 = vmatpush1.msra.mxu0 %v1444
        %1504 = vmatprep.subr.mxu0 0.0
        %1505 = vmatpush1.msra.mxu0 %v1445
        %1506 = vmatprep.subr.mxu0 0.0
        %1507 = vmatpush1.msra.mxu0 %v1446
        %1508 = vmatprep.subr.mxu0 0.0
        %1509 = vmatpush1.msra.mxu0 %v1447
        %1510 = vmatprep.subr.mxu0 0.0
        %1511 = vmatpush1.msra.mxu0 %v1448
        %1512 = vmatprep.subr.mxu0 0.0
        %1513 = vmatpush1.msra.mxu0 %v1449
        %1514 = vmatprep.mubr.f32.mxu0 %v1194
        %1515 = vmatmul.mubr.f32.gmra.mrb[0].mxu0 %v1192
        %v1516 = vpop.f32.mrb[0].mxu0
        %v1517 = vadd.f32 0.0, %v1516
        %v1518 = vpop.f32.mrb[0].mxu0
        %1519 = vmatprep.mubr.f32.mxu0 %v1200
        %1520 = vmatmul.mubr.f32.gmra.mrb[0].mxu0 %v1198
        %v1521 = vpop.f32.mrb[0].mxu0
        %v1522 = vadd.f32 0.0, %v1521
        %v1523 = vpop.f32.mrb[0].mxu0
        %1524 = vdwg.mxu0
        %v1525 = vadd.f32 %v1409, %v1517
        %v1526 = vadd.f32 %v1414, %v1522
        %v1528 = vlaneseq
        %v1529 = vshrl.u32 %v1528, 7
        %v1530 = vsub.s32 0, %v1529
        %v1531 = vrot.slane %v1038, %v1530
        %v1533 = vadd.f32 %v1525, %v1531
        %v1534 = vadd.f32 %v1526, %v1531
        %v1535 = vmax.f32 %v1533, 0.0
        %v1536 = vmax.f32 %v1534, 0.0
        %v1537 = vsel %vm1039, %v858, 0
        %1539 = vmatprep.subr.mxu0 0.0
        %1540 = vmatpush1.msra.mxu0 %v1535
        %1541 = vmatprep.subr.mxu0 0.0
        %1542 = vmatpush1.msra.mxu0 %v1536
        %1543 = vmatprep.subr.mxu0 0.0
        %1544 = vmatpush1.msra.mxu0 0.0
        %1545 = vmatprep.subr.mxu0 0.0
        %1546 = vmatpush1.msra.mxu0 0.0
        %1547 = vmatprep.subr.mxu0 0.0
        %1548 = vmatpush1.msra.mxu0 0.0
        %1549 = vmatprep.subr.mxu0 0.0
        %1550 = vmatpush1.msra.mxu0 0.0
        %1551 = vmatprep.subr.mxu0 0.0
        %1552 = vmatpush1.msra.mxu0 0.0
        %1553 = vmatprep.subr.mxu0 0.0
        %1554 = vmatpush1.msra.mxu0 0.0
        %1555 = vmatprep.subr.mxu0 0.0
        %1556 = vmatpush1.msra.mxu0 0.0
        %1557 = vmatprep.subr.mxu0 0.0
        %1558 = vmatpush1.msra.mxu0 0.0
        %1559 = vmatprep.subr.mxu0 0.0
        %1560 = vmatpush1.msra.mxu0 0.0
        %1561 = vmatprep.subr.mxu0 0.0
        %1562 = vmatpush1.msra.mxu0 0.0
        %1563 = vmatprep.subr.mxu0 0.0
        %1564 = vmatpush1.msra.mxu0 0.0
        %1565 = vmatprep.subr.mxu0 0.0
        %1566 = vmatpush1.msra.mxu0 0.0
        %1567 = vmatprep.subr.mxu0 0.0
        %1568 = vmatpush1.msra.mxu0 0.0
        %1569 = vmatprep.subr.mxu0 0.0
        %1570 = vmatpush1.msra.mxu0 0.0
        %1571 = vmatprep.subr.mxu0 0.0
        %1572 = vmatpush1.msra.mxu0 0.0
        %1573 = vmatprep.subr.mxu0 0.0
        %1574 = vmatpush1.msra.mxu0 0.0
        %1575 = vmatprep.subr.mxu0 0.0
        %1576 = vmatpush1.msra.mxu0 0.0
        %1577 = vmatprep.subr.mxu0 0.0
        %1578 = vmatpush1.msra.mxu0 0.0
        %1579 = vmatprep.subr.mxu0 0.0
        %1580 = vmatpush1.msra.mxu0 0.0
        %1581 = vmatprep.subr.mxu0 0.0
        %1582 = vmatpush1.msra.mxu0 0.0
        %1583 = vmatprep.subr.mxu0 0.0
        %1584 = vmatpush1.msra.mxu0 0.0
        %1585 = vmatprep.subr.mxu0 0.0
        %1586 = vmatpush1.msra.mxu0 0.0
        %1587 = vmatprep.subr.mxu0 0.0
        %1588 = vmatpush1.msra.mxu0 0.0
        %1589 = vmatprep.subr.mxu0 0.0
        %1590 = vmatpush1.msra.mxu0 0.0
        %1591 = vmatprep.subr.mxu0 0.0
        %1592 = vmatpush1.msra.mxu0 0.0
        %1593 = vmatprep.subr.mxu0 0.0
        %1594 = vmatpush1.msra.mxu0 0.0
        %1595 = vmatprep.subr.mxu0 0.0
        %1596 = vmatpush1.msra.mxu0 0.0
        %1597 = vmatprep.subr.mxu0 0.0
        %1598 = vmatpush1.msra.mxu0 0.0
        %1599 = vmatprep.subr.mxu0 0.0
        %1600 = vmatpush1.msra.mxu0 0.0
        %1601 = vmatprep.subr.mxu0 0.0
        %1602 = vmatpush1.msra.mxu0 0.0
        %1603 = vmatprep.mubr.f32.mxu0 0.0
        %1604 = vmatmul.mubr.f32.gmra.mrb[0].mxu0 %v1537
        %v1605 = vpop.f32.mrb[0].mxu0
        %v1606 = vadd.f32 0.0, %v1605
        %v1607 = vpop.f32.mrb[0].mxu0
        %1608 = vdwg.mxu0
        %v1609 = vsel %vm1039, %v866, 0
        %1611 = vmatprep.subr.mxu0 0.0
        %1612 = vmatpush1.msra.mxu0 %v1535
        %1613 = vmatprep.subr.mxu0 0.0
        %1614 = vmatpush1.msra.mxu0 %v1536
        %1615 = vmatprep.subr.mxu0 0.0
        %1616 = vmatpush1.msra.mxu0 0.0
        %1617 = vmatprep.subr.mxu0 0.0
        %1618 = vmatpush1.msra.mxu0 0.0
        %1619 = vmatprep.subr.mxu0 0.0
        %1620 = vmatpush1.msra.mxu0 0.0
        %1621 = vmatprep.subr.mxu0 0.0
        %1622 = vmatpush1.msra.mxu0 0.0
        %1623 = vmatprep.subr.mxu0 0.0
        %1624 = vmatpush1.msra.mxu0 0.0
        %1625 = vmatprep.subr.mxu0 0.0
        %1626 = vmatpush1.msra.mxu0 0.0
        %1627 = vmatprep.subr.mxu0 0.0
        %1628 = vmatpush1.msra.mxu0 0.0
        %1629 = vmatprep.subr.mxu0 0.0
        %1630 = vmatpush1.msra.mxu0 0.0
        %1631 = vmatprep.subr.mxu0 0.0
        %1632 = vmatpush1.msra.mxu0 0.0
        %1633 = vmatprep.subr.mxu0 0.0
        %1634 = vmatpush1.msra.mxu0 0.0
        %1635 = vmatprep.subr.mxu0 0.0
        %1636 = vmatpush1.msra.mxu0 0.0
        %1637 = vmatprep.subr.mxu0 0.0
        %1638 = vmatpush1.msra.mxu0 0.0
        %1639 = vmatprep.subr.mxu0 0.0
        %1640 = vmatpush1.msra.mxu0 0.0
        %1641 = vmatprep.subr.mxu0 0.0
        %1642 = vmatpush1.msra.mxu0 0.0
        %1643 = vmatprep.subr.mxu0 0.0
        %1644 = vmatpush1.msra.mxu0 0.0
        %1645 = vmatprep.subr.mxu0 0.0
        %1646 = vmatpush1.msra.mxu0 0.0
        %1647 = vmatprep.subr.mxu0 0.0
        %1648 = vmatpush1.msra.mxu0 0.0
        %1649 = vmatprep.subr.mxu0 0.0
        %1650 = vmatpush1.msra.mxu0 0.0
        %1651 = vmatprep.subr.mxu0 0.0
        %1652 = vmatpush1.msra.mxu0 0.0
        %1653 = vmatprep.subr.mxu0 0.0
        %1654 = vmatpush1.msra.mxu0 0.0
        %1655 = vmatprep.subr.mxu0 0.0
        %1656 = vmatpush1.msra.mxu0 0.0
        %1657 = vmatprep.subr.mxu0 0.0
        %1658 = vmatpush1.msra.mxu0 0.0
        %1659 = vmatprep.subr.mxu0 0.0
        %1660 = vmatpush1.msra.mxu0 0.0
        %1661 = vmatprep.subr.mxu0 0.0
        %1662 = vmatpush1.msra.mxu0 0.0
        %1663 = vmatprep.subr.mxu0 0.0
        %1664 = vmatpush1.msra.mxu0 0.0
        %1665 = vmatprep.subr.mxu0 0.0
        %1666 = vmatpush1.msra.mxu0 0.0
        %1667 = vmatprep.subr.mxu0 0.0
        %1668 = vmatpush1.msra.mxu0 0.0
        %1669 = vmatprep.subr.mxu0 0.0
        %1670 = vmatpush1.msra.mxu0 0.0
        %1671 = vmatprep.subr.mxu0 0.0
        %1672 = vmatpush1.msra.mxu0 0.0
        %1673 = vmatprep.subr.mxu0 0.0
        %1674 = vmatpush1.msra.mxu0 0.0
        %1675 = vmatprep.mubr.f32.mxu0 0.0
        %1676 = vmatmul.mubr.f32.gmra.mrb[0].mxu0 %v1609
        %v1677 = vpop.f32.mrb[0].mxu0
        %v1678 = vadd.f32 0.0, %v1677
        %v1679 = vpop.f32.mrb[0].mxu0
        %1680 = vdwg.mxu0
        %v1681 = vmax.f32 %v1606, %v1678
        %1682 = vst.msk [vmem:[%s217] sm:$0xff] %vm483, %v1681
        %s1683 = sand.u32 %s137, 1
        %s1684 = scalar_lea.sflag [#allocation3], %s1683
        %s1685 = sand.u32 %s137, 1
        %s1686 = smul.addr %s1685, 8
        %s1687 = scalar_lea.vmem [#allocation2], %s1686
        // Predicated region
        $region41: #{tpu_custom_call.1} parent=39 // pred_check
          %p1688 = pneg %p147
        $region42: #{tpu_custom_call.1} parent=39 // pred_check_branch
          %1690 = sbr.rel (%p1688) target = $region44
        $region43: #{tpu_custom_call.1} parent=39 // pred_region
          %s1692 = ssub.s32 128, 128
          %1693 = vsyncadd %s1684, %s1692
          %s1694 = smul.addr %s19, 128
          %s1695 = scalar_lea.hbm %s5, %s1694
          %s1697 = sshll.u32 %s1687, 4
          %s1698 = int_to_ptr.vmem [resolvable:$true] %s1697
          %1700 = dma.vmem_to_hbm [thread:$0]  %s1698, 128, %s1695, %s1684
        $region44: #{tpu_custom_call.1} parent=39 // pred_fallthru
          _
      $region40: #{tpu_custom_call.1} parent=5 // pred_fallthru
        _
      %p1701 = scmp.le.s32.totalorder 2, %s14
      // Predicated region
      $region45: #{tpu_custom_call.1} parent=5 // pred_check
        %p1702 = pneg %p1701
      $region46: #{tpu_custom_call.1} parent=5 // pred_check_branch
        %1704 = sbr.rel (%p1702) target = $region48
      $region47: #{tpu_custom_call.1} parent=5 // pred_region
        %s1705 = ssub.s32 %s14, 2
        // Predicated region
        $region49: #{tpu_custom_call.1} parent=47 // pred_check
          %p1706 = pneg %p153
        $region50: #{tpu_custom_call.1} parent=47 // pred_check_branch
          %1708 = sbr.rel (%p1706) target = $region52
        $region51: #{tpu_custom_call.1} parent=47 // pred_region
          %s1709 = sand.u32 %s138, 1
          %s1710 = scalar_lea.sflag [#allocation3], %s1709
          %s1711 = sand.u32 %s138, 1
          %s1712 = smul.addr %s1711, 8
          %s1713 = scalar_lea.vmem [#allocation2], %s1712
          %1714 = dma.done %s1710, 128
        $region52: #{tpu_custom_call.1} parent=47 // pred_fallthru
          _
      $region48: #{tpu_custom_call.1} parent=5 // pred_fallthru
        _
    $region6: #{tpu_custom_call.1} parent=1 // loop_footer
      %s18 = sadd.s32 1, %s14
    $region7: #{tpu_custom_call.1} parent=1 // loop_footer_branch
      %13 = sbr.rel target = $region3
    $region8: #{tpu_custom_call.1} parent=1 // loop_exit
      _
    %1715 = vsyncpa [#allocation3], 1
    %s1716 = scalar_lea.sflag [#allocation3], 1
    %1717 = vsyncpa %s1716, 1

</llo_original>
